<compile_context>
chip_gen: v7x
topology: tpu7x:2x2x1
jax: 0.10.0
libtpu: 0.0.40
codegen_flags: <defaults>
</compile_context>

<pallas_src>
import jax
import jax.numpy as jnp
from jax.experimental import pallas as pl
from jax.experimental.pallas import tpu as pltpu

# Fixed architecture sizes from the PyTorch module.
ENC_H1, ENC_H2, ENC_OUT = 256, 512, 256       # encoder MLP: F -> 256 -> 512 -> 256
DEC_H, DEC_OUT = 256, 512                      # decoder MLP: (F+L) -> 256 -> 512

# Offsets into the packed bias array bbig = [be1 | be2 | be3 | bd1 | bd2]
_O_BE1 = 0
_O_BE2 = _O_BE1 + ENC_H1            # 256
_O_BE3 = _O_BE2 + ENC_H2            # 768
_O_BD1 = _O_BE3 + ENC_OUT           # 1024
_O_BD2 = _O_BD1 + DEC_H             # 1280
_BBIG_END = _O_BD2 + DEC_OUT        # 1792


def _dela_kernel(x_ref, we1, we2, we3, wmulv, wd1, wd2, wct, ws,
                 bbig, bsmall, logit, gnoise, eps, eb, ec, ebt,
                 mu_out, lv_out, samp_out, preds_out):
    f32 = jnp.float32
    B, F = x_ref.shape
    L = mu_out.shape[1]
    C = samp_out.shape[0]

    x = x_ref[...]                                                  # (B, F)

    # ---- packed biases (all lane slices at 128-aligned offsets) ----
    be1 = bbig[:, _O_BE1:_O_BE2]
    be2 = bbig[:, _O_BE2:_O_BE3]
    be3 = bbig[:, _O_BE3:_O_BD1]
    bd1 = bbig[:, _O_BD1:_O_BD2]
    bd2 = bbig[:, _O_BD2:_BBIG_END]
    bmu = bsmall[0:1, 0:L]
    blv = bsmall[1:2, 0:L]
    bs = bsmall[2:3, 0:L]
    bc = bsmall[3:4, 0:C]

    # ---- encoder MLP: F -> 256 -> 512 -> 256 (ReLU on hidden layers) ----
    # TODO(synk): encoder dropout (drop_ratio) treated as identity.
    h = jnp.maximum(jnp.dot(x, we1[...], preferred_element_type=f32) + be1, 0.0)
    h = jnp.maximum(jnp.dot(h, we2[...], preferred_element_type=f32) + be2, 0.0)
    enc = jnp.dot(h, we3[...], preferred_element_type=f32) + be3    # (B, 256)

    # ---- fc_mu / fc_logvar fused into one matmul ----
    mulv = jnp.dot(enc, wmulv[...], preferred_element_type=f32)     # (B, 2L)
    mu = mulv[:, 0:L] + bmu                                         # (B, L)
    logvar = mulv[:, L:2 * L] + blv                                 # (B, L)
    mu_out[...] = mu
    lv_out[...] = logvar

    # ---- scale_layer(logit) + hard gumbel-sigmoid ----
    # hard forward: sigmoid((s + g)/tau) > 0.5  <=>  (s + g) > 0  (tau-free).
    logit_s = jnp.dot(logit[...], ws[...], preferred_element_type=f32) + bs
    samples = ((logit_s + gnoise[...]) > 0.0).astype(f32)           # (C, L)
    samp_out[...] = samples

    # ---- batched decoder over all (class, batch) pairs ----
    # Flattened row i = c*B + b.  eb/ec/ebt are constant 0/1 selection matrices
    # built in the wrapper: eb[i, b] = [i % B == b], ec[i, c] = [i // B == c],
    # ebt = eb.T.  Replication becomes tiny MXU matmuls (no reshape/transpose).
    std = jnp.exp(0.5 * logvar)
    noise = std * eps[...]                                          # (B, L)
    eb_v, ec_v, ebt_v = eb[...], ec[...], ebt[...]

    mu_rep = jnp.dot(eb_v, mu, preferred_element_type=f32)          # (C*B, L)
    noise_rep = jnp.dot(eb_v, noise, preferred_element_type=f32)    # (C*B, L)
    samp_rep = jnp.dot(ec_v, samples, preferred_element_type=f32)   # (C*B, L)
    zk = mu_rep + samp_rep * noise_rep                              # (C*B, L)

    wd1x = wd1[0:F, :]                                              # (F, 256)
    wd1z = wd1[F:F + L, :]                                          # (L, 256)
    x_part = jnp.dot(x, wd1x, preferred_element_type=f32)           # (B, 256)
    x_rep = jnp.dot(eb_v, x_part, preferred_element_type=f32)       # (C*B, 256)

    h1 = jnp.maximum(
        x_rep + jnp.dot(zk, wd1z, preferred_element_type=f32) + bd1, 0.0)    # (C*B, 256)
    h2 = jnp.dot(h1, wd2[...], preferred_element_type=f32) + bd2             # (C*B, 512)

    # ---- grouped-conv classifier: preds[b, c] = h2[c*B+b, :] . wc[c, :] + bc[c]
    pred_all = jnp.dot(h2, wct[...], preferred_element_type=f32)    # (C*B, C)
    preds = jnp.dot(ebt_v, ec_v * pred_all,
                    preferred_element_type=f32) + bc                # (B, C)
    preds_out[...] = preds                                          # single store


def pack_params(p):
    """Pack the many small parameters into a few arrays (fewer input DMAs)."""
    L = p["logit"].shape[1]
    C = p["logit"].shape[0]
    wp = max(L, C)

    def pad_lanes(v):
        return jnp.pad(v, ((0, 0), (0, wp - v.shape[1])))

    return {
        "we1": p["we1"], "we2": p["we2"], "we3": p["we3"],
        "wmulv": jnp.concatenate([p["wmu"], p["wlv"]], axis=1),        # (256, 2L)
        "wd1": jnp.concatenate([p["wd1x"], p["wd1z"]], axis=0),        # (F+L, 256)
        "wd2": p["wd2"],
        "wct": p["wc"].T,                                              # (512, C)
        "ws": p["ws"],
        "bbig": jnp.concatenate(
            [p["be1"], p["be2"], p["be3"], p["bd1"], p["bd2"]], axis=1),  # (1, 1792)
        "bsmall": jnp.concatenate(
            [pad_lanes(p["bmu"]), pad_lanes(p["blv"]),
             pad_lanes(p["bs"]), pad_lanes(p["bc"])], axis=0),         # (4, max(L,C))
        "logit": p["logit"],
    }


def dela_forward(x, packed, gnoise, eps, tau=1.0):
    # `tau` only affects gradients of the straight-through estimator; the hard
    # forward samples are tau-independent, so it is not passed to the kernel
    # (annealing tau never forces a recompile).
    del tau
    B = x.shape[0]
    C, L = packed["logit"].shape

    eye_b = jnp.eye(B, dtype=jnp.float32)
    eye_c = jnp.eye(C, dtype=jnp.float32)
    eb = jnp.tile(eye_b, (C, 1))                    # (C*B, B)
    ec = jnp.repeat(eye_c, B, axis=0)               # (C*B, C)
    ebt = eb.T                                      # (B, C*B)

    inputs = (x, packed["we1"], packed["we2"], packed["we3"], packed["wmulv"],
              packed["wd1"], packed["wd2"], packed["wct"], packed["ws"],
              packed["bbig"], packed["bsmall"], packed["logit"], gnoise, eps,
              eb, ec, ebt)

    vmem = pl.BlockSpec(memory_space=pltpu.MemorySpace.VMEM)
    out_shape = (
        jax.ShapeDtypeStruct((B, L), jnp.float32),   # z (= mu)
        jax.ShapeDtypeStruct((B, L), jnp.float32),   # n_logvar
        jax.ShapeDtypeStruct((C, L), jnp.float32),   # samples (hard gumbel-sigmoid)
        jax.ShapeDtypeStruct((B, C), jnp.float32),   # preds
    )
    return pl.pallas_call(
        _dela_kernel,
        out_shape=out_shape,
        in_specs=[vmem] * len(inputs),
        out_specs=tuple([vmem] * len(out_shape)),
    )(*inputs)


def dela_ref(x, p, gnoise, eps, tau):
    """Pure-JAX reference of the same forward, for correctness checking."""
    relu = jax.nn.relu
    h = relu(x @ p["we1"] + p["be1"])
    h = relu(h @ p["we2"] + p["be2"])
    enc = h @ p["we3"] + p["be3"]
    mu = enc @ p["wmu"] + p["bmu"]
    logvar = enc @ p["wlv"] + p["blv"]
    logit_s = p["logit"] @ p["ws"] + p["bs"]
    samples = (jax.nn.sigmoid((logit_s + gnoise) / tau) > 0.5).astype(jnp.float32)
    std = jnp.exp(0.5 * logvar)
    zk = mu[:, None, :] + samples[None, :, :] * std[:, None, :] * eps[:, None, :]
    B, C, _ = zk.shape
    xb = jnp.broadcast_to(x[:, None, :], (B, C, x.shape[1]))
    cat = jnp.concatenate([xb, zk], axis=2)
    wd1 = jnp.concatenate([p["wd1x"], p["wd1z"]], axis=0)
    h1 = relu(jnp.einsum('bcf,fh->bch', cat, wd1) + p["bd1"])
    h2 = jnp.einsum('bch,ho->bco', h1, p["wd2"]) + p["bd2"]
    preds = jnp.sum(h2 * p["wc"][None, :, :], axis=2) + p["bc"][0]
    return mu, logvar, samples, preds


def init_params(key, F, L, C):
    ks = iter(jax.random.split(key, 32))

    def linear(fan_in, fan_out):
        bound = 1.0 / float(fan_in) ** 0.5
        w = jax.random.uniform(next(ks), (fan_in, fan_out), jnp.float32, -bound, bound)
        b = jax.random.uniform(next(ks), (1, fan_out), jnp.float32, -bound, bound)
        return w, b

    p = {}
    # encoder MLP: F -> 256 -> 512 -> 256
    p["we1"], p["be1"] = linear(F, ENC_H1)
    p["we2"], p["be2"] = linear(ENC_H1, ENC_H2)
    p["we3"], p["be3"] = linear(ENC_H2, ENC_OUT)
    # fc_mu / fc_logvar
    p["wmu"], p["bmu"] = linear(ENC_OUT, L)
    p["wlv"], p["blv"] = linear(ENC_OUT, L)
    # logit parameter ~ U(-10, 10)
    p["logit"] = jax.random.uniform(next(ks), (C, L), jnp.float32, -10.0, 10.0)
    # scale_layer: Linear(L, L) with bias constant-initialized to 2.0
    p["ws"], _ = linear(L, L)
    p["bs"] = jnp.full((1, L), 2.0, jnp.float32)
    # decoder MLP: (F + L) -> 256 -> 512   (first weight split into x / z parts)
    wd1, p["bd1"] = linear(F + L, DEC_H)
    p["wd1x"], p["wd1z"] = wd1[:F], wd1[F:]
    p["wd2"], p["bd2"] = linear(DEC_H, DEC_OUT)
    # classifier Conv1d(C, C, 512, groups=C): weight (C, 1, 512) -> (C, 512)
    boundc = 1.0 / float(DEC_OUT) ** 0.5
    p["wc"] = jax.random.uniform(next(ks), (C, DEC_OUT), jnp.float32, -boundc, boundc)
    p["bc"] = jax.random.uniform(next(ks), (1, C), jnp.float32, -boundc, boundc)
    return p


if __name__ == "__main__":
    F, L, C, B = 32, 16, 6, 4        # in_features, latent_dim, num_classes, batch
    tau = 1.0
    key = jax.random.PRNGKey(0)
    kx, kp, kg, ke = jax.random.split(key, 4)

    x = jax.random.normal(kx, (B, F), jnp.float32)
    params = init_params(kp, F, L, C)
    packed = pack_params(params)      # pack once, reuse across calls

    # logistic noise == Gumbel(g1) - Gumbel(g2), used by gumbel_sigmoid
    u = jax.random.uniform(kg, (C, L), jnp.float32, 1e-6, 1.0 - 1e-6)
    gnoise = jnp.log(u) - jnp.log1p(-u)
    eps = jax.random.normal(ke, (B, L), jnp.float32)

    mu, logvar, samples, preds = jax.block_until_ready(
        dela_forward(x, packed, gnoise, eps, tau))

    r_mu, r_lv, r_s, r_p = dela_ref(x, params, gnoise, eps, tau)
    assert jnp.allclose(mu, r_mu, atol=1e-4, rtol=1e-4)
    assert jnp.allclose(logvar, r_lv, atol=1e-4, rtol=1e-4)
    assert jnp.allclose(samples, r_s)
    assert jnp.allclose(preds, r_p, atol=1e-3, rtol=1e-3)
    print("KERNEL_OK")
</pallas_src>

<mosaic_0001>
module attributes {stable_mosaic.version = 11 : i64} {
  func.func @_dela_kernel(%arg0: memref<4x32xf32, #tpu.memory_space<vmem>>, %arg1: memref<32x256xf32, #tpu.memory_space<vmem>>, %arg2: memref<256x512xf32, #tpu.memory_space<vmem>>, %arg3: memref<512x256xf32, #tpu.memory_space<vmem>>, %arg4: memref<256x32xf32, #tpu.memory_space<vmem>>, %arg5: memref<48x256xf32, #tpu.memory_space<vmem>>, %arg6: memref<256x512xf32, #tpu.memory_space<vmem>>, %arg7: memref<512x6xf32, #tpu.memory_space<vmem>>, %arg8: memref<16x16xf32, #tpu.memory_space<vmem>>, %arg9: memref<1x1792xf32, #tpu.memory_space<vmem>>, %arg10: memref<4x16xf32, #tpu.memory_space<vmem>>, %arg11: memref<6x16xf32, #tpu.memory_space<vmem>>, %arg12: memref<6x16xf32, #tpu.memory_space<vmem>>, %arg13: memref<4x16xf32, #tpu.memory_space<vmem>>, %arg14: memref<24x4xf32, #tpu.memory_space<vmem>>, %arg15: memref<24x6xf32, #tpu.memory_space<vmem>>, %arg16: memref<4x24xf32, #tpu.memory_space<vmem>>, %arg17: memref<4x16xf32, #tpu.memory_space<vmem>>, %arg18: memref<4x16xf32, #tpu.memory_space<vmem>>, %arg19: memref<6x16xf32, #tpu.memory_space<vmem>>, %arg20: memref<4x6xf32, #tpu.memory_space<vmem>>) attributes {dimension_semantics = [], scalar_prefetch = 0 : i64, scratch_operands = 0 : i64, tpu.core_type = #tpu.core_type<tc>} {
    %c0 = arith.constant 0 : index
    %c0_0 = arith.constant 0 : index
    %0 = vector.load %arg0[%c0, %c0_0] : memref<4x32xf32, #tpu.memory_space<vmem>>, vector<4x32xf32>
    %c0_1 = arith.constant 0 : index
    %c0_2 = arith.constant 0 : index
    %1 = vector.load %arg9[%c0_1, %c0_2] : memref<1x1792xf32, #tpu.memory_space<vmem>>, vector<1x256xf32>
    %c0_3 = arith.constant 0 : index
    %c256 = arith.constant 256 : index
    %2 = vector.load %arg9[%c0_3, %c256] : memref<1x1792xf32, #tpu.memory_space<vmem>>, vector<1x512xf32>
    %c0_4 = arith.constant 0 : index
    %c768 = arith.constant 768 : index
    %3 = vector.load %arg9[%c0_4, %c768] : memref<1x1792xf32, #tpu.memory_space<vmem>>, vector<1x256xf32>
    %c0_5 = arith.constant 0 : index
    %c1024 = arith.constant 1024 : index
    %4 = vector.load %arg9[%c0_5, %c1024] : memref<1x1792xf32, #tpu.memory_space<vmem>>, vector<1x256xf32>
    %c0_6 = arith.constant 0 : index
    %c1280 = arith.constant 1280 : index
    %5 = vector.load %arg9[%c0_6, %c1280] : memref<1x1792xf32, #tpu.memory_space<vmem>>, vector<1x512xf32>
    %c0_7 = arith.constant 0 : index
    %c0_8 = arith.constant 0 : index
    %6 = vector.load %arg10[%c0_7, %c0_8] : memref<4x16xf32, #tpu.memory_space<vmem>>, vector<1x16xf32>
    %c1 = arith.constant 1 : index
    %c0_9 = arith.constant 0 : index
    %7 = vector.load %arg10[%c1, %c0_9] : memref<4x16xf32, #tpu.memory_space<vmem>>, vector<1x16xf32>
    %c2 = arith.constant 2 : index
    %c0_10 = arith.constant 0 : index
    %8 = vector.load %arg10[%c2, %c0_10] : memref<4x16xf32, #tpu.memory_space<vmem>>, vector<1x16xf32>
    %c3 = arith.constant 3 : index
    %c0_11 = arith.constant 0 : index
    %9 = vector.load %arg10[%c3, %c0_11] : memref<4x16xf32, #tpu.memory_space<vmem>>, vector<1x6xf32>
    %c0_12 = arith.constant 0 : index
    %c0_13 = arith.constant 0 : index
    %10 = vector.load %arg1[%c0_12, %c0_13] : memref<32x256xf32, #tpu.memory_space<vmem>>, vector<32x256xf32>
    %cst = arith.constant dense<0.000000e+00> : vector<4x256xf32>
    %11 = tpu.matmul %0, %10, %cst {dimension_numbers = #tpu.dot_dimension_numbers<[1], [0], [0], [1], [0, 0, 1, 1], [], []>} : vector<4x32xf32>, vector<32x256xf32>, vector<4x256xf32> -> vector<4x256xf32>
    %12 = vector.broadcast %1 : vector<1x256xf32> to vector<4x256xf32>
    %13 = arith.addf %11, %12 : vector<4x256xf32>
    %cst_14 = arith.constant 0.000000e+00 : f32
    %14 = vector.broadcast %cst_14 : f32 to vector<4x256xf32>
    %15 = arith.maximumf %13, %14 : vector<4x256xf32>
    %c0_15 = arith.constant 0 : index
    %c0_16 = arith.constant 0 : index
    %16 = vector.load %arg2[%c0_15, %c0_16] : memref<256x512xf32, #tpu.memory_space<vmem>>, vector<256x512xf32>
    %cst_17 = arith.constant dense<0.000000e+00> : vector<4x512xf32>
    %17 = tpu.matmul %15, %16, %cst_17 {dimension_numbers = #tpu.dot_dimension_numbers<[1], [0], [0], [1], [0, 0, 1, 1], [], []>} : vector<4x256xf32>, vector<256x512xf32>, vector<4x512xf32> -> vector<4x512xf32>
    %18 = vector.broadcast %2 : vector<1x512xf32> to vector<4x512xf32>
    %19 = arith.addf %17, %18 : vector<4x512xf32>
    %cst_18 = arith.constant 0.000000e+00 : f32
    %20 = vector.broadcast %cst_18 : f32 to vector<4x512xf32>
    %21 = arith.maximumf %19, %20 : vector<4x512xf32>
    %c0_19 = arith.constant 0 : index
    %c0_20 = arith.constant 0 : index
    %22 = vector.load %arg3[%c0_19, %c0_20] : memref<512x256xf32, #tpu.memory_space<vmem>>, vector<512x256xf32>
    %cst_21 = arith.constant dense<0.000000e+00> : vector<4x256xf32>
    %23 = tpu.matmul %21, %22, %cst_21 {dimension_numbers = #tpu.dot_dimension_numbers<[1], [0], [0], [1], [0, 0, 1, 1], [], []>} : vector<4x512xf32>, vector<512x256xf32>, vector<4x256xf32> -> vector<4x256xf32>
    %24 = vector.broadcast %3 : vector<1x256xf32> to vector<4x256xf32>
    %25 = arith.addf %23, %24 : vector<4x256xf32>
    %c0_22 = arith.constant 0 : index
    %c0_23 = arith.constant 0 : index
    %26 = vector.load %arg4[%c0_22, %c0_23] : memref<256x32xf32, #tpu.memory_space<vmem>>, vector<256x32xf32>
    %cst_24 = arith.constant dense<0.000000e+00> : vector<4x32xf32>
    %27 = tpu.matmul %25, %26, %cst_24 {dimension_numbers = #tpu.dot_dimension_numbers<[1], [0], [0], [1], [0, 0, 1, 1], [], []>} : vector<4x256xf32>, vector<256x32xf32>, vector<4x32xf32> -> vector<4x32xf32>
    %28 = vector.extract_strided_slice %27 {offsets = [0, 0], sizes = [4, 16], strides = [1, 1]} : vector<4x32xf32> to vector<4x16xf32>
    %29 = vector.broadcast %6 : vector<1x16xf32> to vector<4x16xf32>
    %30 = arith.addf %28, %29 : vector<4x16xf32>
    %31 = vector.extract_strided_slice %27 {offsets = [0, 16], sizes = [4, 16], strides = [1, 1]} : vector<4x32xf32> to vector<4x16xf32>
    %32 = vector.broadcast %7 : vector<1x16xf32> to vector<4x16xf32>
    %33 = arith.addf %31, %32 : vector<4x16xf32>
    %c0_25 = arith.constant 0 : index
    %c0_26 = arith.constant 0 : index
    %34 = vector.load %arg17[%c0_25, %c0_26] : memref<4x16xf32, #tpu.memory_space<vmem>>, vector<4x16xf32>
    tpu.vector_store %arg17[%c0_25, %c0_26], %30 {strides = array<i32>} : memref<4x16xf32, #tpu.memory_space<vmem>>, vector<4x16xf32>,
    %c0_27 = arith.constant 0 : index
    %c0_28 = arith.constant 0 : index
    %35 = vector.load %arg18[%c0_27, %c0_28] : memref<4x16xf32, #tpu.memory_space<vmem>>, vector<4x16xf32>
    tpu.vector_store %arg18[%c0_27, %c0_28], %33 {strides = array<i32>} : memref<4x16xf32, #tpu.memory_space<vmem>>, vector<4x16xf32>,
    %c0_29 = arith.constant 0 : index
    %c0_30 = arith.constant 0 : index
    %36 = vector.load %arg11[%c0_29, %c0_30] : memref<6x16xf32, #tpu.memory_space<vmem>>, vector<6x16xf32>
    %c0_31 = arith.constant 0 : index
    %c0_32 = arith.constant 0 : index
    %37 = vector.load %arg8[%c0_31, %c0_32] : memref<16x16xf32, #tpu.memory_space<vmem>>, vector<16x16xf32>
    %cst_33 = arith.constant dense<0.000000e+00> : vector<6x16xf32>
    %38 = tpu.matmul %36, %37, %cst_33 {dimension_numbers = #tpu.dot_dimension_numbers<[1], [0], [0], [1], [0, 0, 1, 1], [], []>} : vector<6x16xf32>, vector<16x16xf32>, vector<6x16xf32> -> vector<6x16xf32>
    %39 = vector.broadcast %8 : vector<1x16xf32> to vector<6x16xf32>
    %40 = arith.addf %38, %39 : vector<6x16xf32>
    %c0_34 = arith.constant 0 : index
    %c0_35 = arith.constant 0 : index
    %41 = vector.load %arg12[%c0_34, %c0_35] : memref<6x16xf32, #tpu.memory_space<vmem>>, vector<6x16xf32>
    %42 = arith.addf %40, %41 : vector<6x16xf32>
    %cst_36 = arith.constant 0.000000e+00 : f32
    %43 = vector.broadcast %cst_36 : f32 to vector<6x16xf32>
    %44 = arith.cmpf ogt, %42, %43 : vector<6x16xf32>
    %45 = arith.extui %44 : vector<6x16xi1> to vector<6x16xi32>
    %46 = arith.sitofp %45 : vector<6x16xi32> to vector<6x16xf32>
    %c0_37 = arith.constant 0 : index
    %c0_38 = arith.constant 0 : index
    %47 = vector.load %arg19[%c0_37, %c0_38] : memref<6x16xf32, #tpu.memory_space<vmem>>, vector<6x16xf32>
    tpu.vector_store %arg19[%c0_37, %c0_38], %46 {strides = array<i32>} : memref<6x16xf32, #tpu.memory_space<vmem>>, vector<6x16xf32>,
    %cst_39 = arith.constant 5.000000e-01 : f32
    %48 = vector.broadcast %cst_39 : f32 to vector<4x16xf32>
    %49 = arith.mulf %48, %33 : vector<4x16xf32>
    %50 = math.exp %49 : vector<4x16xf32>
    %c0_40 = arith.constant 0 : index
    %c0_41 = arith.constant 0 : index
    %51 = vector.load %arg13[%c0_40, %c0_41] : memref<4x16xf32, #tpu.memory_space<vmem>>, vector<4x16xf32>
    %52 = arith.mulf %50, %51 : vector<4x16xf32>
    %c0_42 = arith.constant 0 : index
    %c0_43 = arith.constant 0 : index
    %53 = vector.load %arg14[%c0_42, %c0_43] : memref<24x4xf32, #tpu.memory_space<vmem>>, vector<24x4xf32>
    %c0_44 = arith.constant 0 : index
    %c0_45 = arith.constant 0 : index
    %54 = vector.load %arg15[%c0_44, %c0_45] : memref<24x6xf32, #tpu.memory_space<vmem>>, vector<24x6xf32>
    %c0_46 = arith.constant 0 : index
    %c0_47 = arith.constant 0 : index
    %55 = vector.load %arg16[%c0_46, %c0_47] : memref<4x24xf32, #tpu.memory_space<vmem>>, vector<4x24xf32>
    %cst_48 = arith.constant dense<0.000000e+00> : vector<24x16xf32>
    %56 = tpu.matmul %53, %30, %cst_48 {dimension_numbers = #tpu.dot_dimension_numbers<[1], [0], [0], [1], [0, 0, 1, 1], [], []>} : vector<24x4xf32>, vector<4x16xf32>, vector<24x16xf32> -> vector<24x16xf32>
    %cst_49 = arith.constant dense<0.000000e+00> : vector<24x16xf32>
    %57 = tpu.matmul %53, %52, %cst_49 {dimension_numbers = #tpu.dot_dimension_numbers<[1], [0], [0], [1], [0, 0, 1, 1], [], []>} : vector<24x4xf32>, vector<4x16xf32>, vector<24x16xf32> -> vector<24x16xf32>
    %cst_50 = arith.constant dense<0.000000e+00> : vector<24x16xf32>
    %58 = tpu.matmul %54, %46, %cst_50 {dimension_numbers = #tpu.dot_dimension_numbers<[1], [0], [0], [1], [0, 0, 1, 1], [], []>} : vector<24x6xf32>, vector<6x16xf32>, vector<24x16xf32> -> vector<24x16xf32>
    %59 = arith.mulf %58, %57 : vector<24x16xf32>
    %60 = arith.addf %56, %59 : vector<24x16xf32>
    %c0_51 = arith.constant 0 : index
    %c0_52 = arith.constant 0 : index
    %61 = vector.load %arg5[%c0_51, %c0_52] : memref<48x256xf32, #tpu.memory_space<vmem>>, vector<32x256xf32>
    %c32 = arith.constant 32 : index
    %c0_53 = arith.constant 0 : index
    %62 = vector.load %arg5[%c32, %c0_53] : memref<48x256xf32, #tpu.memory_space<vmem>>, vector<16x256xf32>
    %cst_54 = arith.constant dense<0.000000e+00> : vector<4x256xf32>
    %63 = tpu.matmul %0, %61, %cst_54 {dimension_numbers = #tpu.dot_dimension_numbers<[1], [0], [0], [1], [0, 0, 1, 1], [], []>} : vector<4x32xf32>, vector<32x256xf32>, vector<4x256xf32> -> vector<4x256xf32>
    %cst_55 = arith.constant dense<0.000000e+00> : vector<24x256xf32>
    %64 = tpu.matmul %53, %63, %cst_55 {dimension_numbers = #tpu.dot_dimension_numbers<[1], [0], [0], [1], [0, 0, 1, 1], [], []>} : vector<24x4xf32>, vector<4x256xf32>, vector<24x256xf32> -> vector<24x256xf32>
    %cst_56 = arith.constant dense<0.000000e+00> : vector<24x256xf32>
    %65 = tpu.matmul %60, %62, %cst_56 {dimension_numbers = #tpu.dot_dimension_numbers<[1], [0], [0], [1], [0, 0, 1, 1], [], []>} : vector<24x16xf32>, vector<16x256xf32>, vector<24x256xf32> -> vector<24x256xf32>
    %66 = arith.addf %64, %65 : vector<24x256xf32>
    %67 = vector.broadcast %4 : vector<1x256xf32> to vector<24x256xf32>
    %68 = arith.addf %66, %67 : vector<24x256xf32>
    %cst_57 = arith.constant 0.000000e+00 : f32
    %69 = vector.broadcast %cst_57 : f32 to vector<24x256xf32>
    %70 = arith.maximumf %68, %69 : vector<24x256xf32>
    %c0_58 = arith.constant 0 : index
    %c0_59 = arith.constant 0 : index
    %71 = vector.load %arg6[%c0_58, %c0_59] : memref<256x512xf32, #tpu.memory_space<vmem>>, vector<256x512xf32>
    %cst_60 = arith.constant dense<0.000000e+00> : vector<24x512xf32>
    %72 = tpu.matmul %70, %71, %cst_60 {dimension_numbers = #tpu.dot_dimension_numbers<[1], [0], [0], [1], [0, 0, 1, 1], [], []>} : vector<24x256xf32>, vector<256x512xf32>, vector<24x512xf32> -> vector<24x512xf32>
    %73 = vector.broadcast %5 : vector<1x512xf32> to vector<24x512xf32>
    %74 = arith.addf %72, %73 : vector<24x512xf32>
    %c0_61 = arith.constant 0 : index
    %c0_62 = arith.constant 0 : index
    %75 = vector.load %arg7[%c0_61, %c0_62] : memref<512x6xf32, #tpu.memory_space<vmem>>, vector<512x6xf32>
    %cst_63 = arith.constant dense<0.000000e+00> : vector<24x6xf32>
    %76 = tpu.matmul %74, %75, %cst_63 {dimension_numbers = #tpu.dot_dimension_numbers<[1], [0], [0], [1], [0, 0, 1, 1], [], []>} : vector<24x512xf32>, vector<512x6xf32>, vector<24x6xf32> -> vector<24x6xf32>
    %77 = arith.mulf %54, %76 : vector<24x6xf32>
    %cst_64 = arith.constant dense<0.000000e+00> : vector<4x6xf32>
    %78 = tpu.matmul %55, %77, %cst_64 {dimension_numbers = #tpu.dot_dimension_numbers<[1], [0], [0], [1], [0, 0, 1, 1], [], []>} : vector<4x24xf32>, vector<24x6xf32>, vector<4x6xf32> -> vector<4x6xf32>
    %79 = vector.broadcast %9 : vector<1x6xf32> to vector<4x6xf32>
    %80 = arith.addf %78, %79 : vector<4x6xf32>
    %c0_65 = arith.constant 0 : index
    %c0_66 = arith.constant 0 : index
    %81 = vector.load %arg20[%c0_65, %c0_66] : memref<4x6xf32, #tpu.memory_space<vmem>>, vector<4x6xf32>
    tpu.vector_store %arg20[%c0_65, %c0_66], %80 {strides = array<i32>} : memref<4x6xf32, #tpu.memory_space<vmem>>, vector<4x6xf32>,
    return
  }
}

</mosaic_0001>

<llo_original>
// kernel: tpu_custom_call.1
$region0: #{tpu_custom_call.1}
  #allocation0 [shape = 'u32[]', space=smem, size = 0x4, offset = 0x4, fixed_abs, tag = 'smem constant byte address 0x4 - core index']
  #allocation1 [shape = 'u32[144,128]{1,0:T(1,128)}', space=vmem, size = 0x12000, scoped, tag = 'internal scratch']
  %s0 = inlined_call_operand.vmem [shape: f32[4,32], index: 0, kind: input, shape index: {}]
  %s1 = inlined_call_operand.vmem [shape: f32[32,256], index: 1, kind: input, shape index: {}]
  %s2 = inlined_call_operand.hbm [shape: f32[256,512], index: 2, kind: input, shape index: {}]
  %s3 = inlined_call_operand.hbm [shape: f32[512,256], index: 3, kind: input, shape index: {}]
  %s4 = inlined_call_operand.vmem [shape: f32[256,32], index: 4, kind: input, shape index: {}]
  %s5 = inlined_call_operand.vmem [shape: f32[48,256], index: 5, kind: input, shape index: {}]
  %s6 = inlined_call_operand.hbm [shape: f32[256,512], index: 6, kind: input, shape index: {}]
  %s7 = inlined_call_operand.vmem [shape: f32[512,6], index: 7, kind: input, shape index: {}]
  %s8 = inlined_call_operand.vmem [shape: f32[16,16], index: 8, kind: input, shape index: {}]
  %s9 = inlined_call_operand.vmem [shape: f32[1,1792], index: 9, kind: input, shape index: {}]
  %s10 = inlined_call_operand.vmem [shape: f32[4,16], index: 10, kind: input, shape index: {}]
  %s11 = inlined_call_operand.vmem [shape: f32[6,16], index: 11, kind: input, shape index: {}]
  %s12 = inlined_call_operand.vmem [shape: f32[6,16], index: 12, kind: input, shape index: {}]
  %s13 = inlined_call_operand.vmem [shape: f32[4,16], index: 13, kind: input, shape index: {}]
  %s14 = inlined_call_operand.vmem [shape: f32[24,4], index: 14, kind: input, shape index: {}]
  %s15 = inlined_call_operand.vmem [shape: f32[24,6], index: 15, kind: input, shape index: {}]
  %s16 = inlined_call_operand.vmem [shape: f32[4,24], index: 16, kind: input, shape index: {}]
  %s17 = inlined_call_operand.hbm [shape: f32[4,16], index: 17, kind: output, shape index: {0}]
  %s18 = inlined_call_operand.hbm [shape: f32[4,16], index: 18, kind: output, shape index: {1}]
  %s19 = inlined_call_operand.hbm [shape: f32[6,16], index: 19, kind: output, shape index: {2}]
  %s20 = inlined_call_operand.hbm [shape: f32[4,6], index: 20, kind: output, shape index: {3}]
  %21 = xla_tuple %s17, %s18, %s19, %s20
  %s22 = sld [smem:[#allocation0]]
  $region114: #{tpu_custom_call.1} parent=0
    _
  %s24 = ssub.s32 1, %s22
  %s25 = scalar_select 0, %s24, %s22
  $region1: #{tpu_custom_call.1} parent=0
    #allocation2 [shape = 'u8[524288]{0}', space=vmem, size = 0x80000, scoped, tag = 'input window, operand 2, single buffered']
    #allocation3 [shape = 's32[1]{0}', space=sflag, size = 0x4, scoped, tag = 'scoped memory for tpu_custom_call.1']
    #allocation4 [shape = 's32[1]{0}', space=sflag, size = 0x4, scoped, tag = 'scoped memory for tpu_custom_call.1']
    #allocation5 [shape = 'u8[524288]{0}', space=vmem, size = 0x80000, scoped, tag = 'input window, operand 3, single buffered']
    #allocation6 [shape = 's32[1]{0}', space=sflag, size = 0x4, scoped, tag = 'scoped memory for tpu_custom_call.1']
    #allocation7 [shape = 'u8[524288]{0}', space=vmem, size = 0x80000, scoped, tag = 'input window, operand 6, single buffered']
    #allocation8 [shape = 'u8[2048]{0}', space=vmem, size = 0x800, scoped, tag = 'output window, operand 0, single buffered']
    #allocation9 [shape = 'u8[2048]{0}', space=vmem, size = 0x800, scoped, tag = 'output window, operand 1, single buffered']
    #allocation10 [shape = 's32[1]{0}', space=sflag, size = 0x4, scoped, tag = 'scoped memory for tpu_custom_call.1']
    #allocation11 [shape = 'u8[4096]{0}', space=vmem, size = 0x1000, scoped, tag = 'output window, operand 2, single buffered']
    #allocation12 [shape = 'u8[2048]{0}', space=vmem, size = 0x800, scoped, tag = 'output window, operand 3, single buffered']
    #allocation13 [shape = 's32[1]{0}', space=sflag, size = 0x4, scoped, tag = 'scoped memory for tpu_custom_call.1']
    %26 = vsyncpa [#allocation3], 0
    %27 = vsyncpa [#allocation6], 0
    %28 = vsyncpa [#allocation4], 0
    %29 = vsyncpa [#allocation10], 0
    %30 = vsyncpa [#allocation13], 0
    // Predicated region
    $region2: #{tpu_custom_call.1} parent=1 // pred_check
      _
    $region3: #{tpu_custom_call.1} parent=1 // pred_check_branch
      %32 = sbr.rel (0) target = $region5
    $region4: #{tpu_custom_call.1} parent=1 // pred_region
      _
    $region5: #{tpu_custom_call.1} parent=1 // pred_fallthru
      _
    // Predicated region
    $region6: #{tpu_custom_call.1} parent=1 // pred_check
      _
    $region7: #{tpu_custom_call.1} parent=1 // pred_check_branch
      %34 = sbr.rel (0) target = $region9
    $region8: #{tpu_custom_call.1} parent=1 // pred_region
      _
    $region9: #{tpu_custom_call.1} parent=1 // pred_fallthru
      _
    // Predicated region
    $region10: #{tpu_custom_call.1} parent=1 // pred_check
      _
    $region11: #{tpu_custom_call.1} parent=1 // pred_check_branch
      %36 = sbr.rel (0) target = $region13
    $region12: #{tpu_custom_call.1} parent=1 // pred_region
      %s38 = ssub.s32 16384, 16384
      %39 = vsyncadd [#allocation3], %s38
      %s40 = sshll.u32 [#allocation2], 4
      %s41 = int_to_ptr.vmem [resolvable:$true] %s40
      %46 = dma.hbm_to_vmem [thread:$0]  %s2, 16384, %s41, [#allocation3], 512, 512, 32
    $region13: #{tpu_custom_call.1} parent=1 // pred_fallthru
      _
    // Predicated region
    $region14: #{tpu_custom_call.1} parent=1 // pred_check
      _
    $region15: #{tpu_custom_call.1} parent=1 // pred_check_branch
      %48 = sbr.rel (0) target = $region17
    $region16: #{tpu_custom_call.1} parent=1 // pred_region
      %s50 = ssub.s32 16384, 16384
      %51 = vsyncadd [#allocation6], %s50
      %s52 = sshll.u32 [#allocation5], 4
      %s53 = int_to_ptr.vmem [resolvable:$true] %s52
      %58 = dma.hbm_to_vmem [thread:$0]  %s3, 16384, %s53, [#allocation6], 256, 256, 16
    $region17: #{tpu_custom_call.1} parent=1 // pred_fallthru
      _
    // Predicated region
    $region18: #{tpu_custom_call.1} parent=1 // pred_check
      _
    $region19: #{tpu_custom_call.1} parent=1 // pred_check_branch
      %60 = sbr.rel (0) target = $region21
    $region20: #{tpu_custom_call.1} parent=1 // pred_region
      _
    $region21: #{tpu_custom_call.1} parent=1 // pred_fallthru
      _
    // Predicated region
    $region22: #{tpu_custom_call.1} parent=1 // pred_check
      _
    $region23: #{tpu_custom_call.1} parent=1 // pred_check_branch
      %62 = sbr.rel (0) target = $region25
    $region24: #{tpu_custom_call.1} parent=1 // pred_region
      _
    $region25: #{tpu_custom_call.1} parent=1 // pred_fallthru
      _
    // Predicated region
    $region26: #{tpu_custom_call.1} parent=1 // pred_check
      _
    $region27: #{tpu_custom_call.1} parent=1 // pred_check_branch
      %64 = sbr.rel (0) target = $region29
    $region28: #{tpu_custom_call.1} parent=1 // pred_region
      %s66 = ssub.s32 16384, 16384
      %67 = vsyncadd [#allocation6], %s66
      %s68 = sshll.u32 [#allocation7], 4
      %s69 = int_to_ptr.vmem [resolvable:$true] %s68
      %74 = dma.hbm_to_vmem [thread:$0]  %s6, 16384, %s69, [#allocation6], 512, 512, 32
    $region29: #{tpu_custom_call.1} parent=1 // pred_fallthru
      _
    // Predicated region
    $region30: #{tpu_custom_call.1} parent=1 // pred_check
      _
    $region31: #{tpu_custom_call.1} parent=1 // pred_check_branch
      %76 = sbr.rel (0) target = $region33
    $region32: #{tpu_custom_call.1} parent=1 // pred_region
      _
    $region33: #{tpu_custom_call.1} parent=1 // pred_fallthru
      _
    // Predicated region
    $region34: #{tpu_custom_call.1} parent=1 // pred_check
      _
    $region35: #{tpu_custom_call.1} parent=1 // pred_check_branch
      %78 = sbr.rel (0) target = $region37
    $region36: #{tpu_custom_call.1} parent=1 // pred_region
      _
    $region37: #{tpu_custom_call.1} parent=1 // pred_fallthru
      _
    // Predicated region
    $region38: #{tpu_custom_call.1} parent=1 // pred_check
      _
    $region39: #{tpu_custom_call.1} parent=1 // pred_check_branch
      %80 = sbr.rel (0) target = $region41
    $region40: #{tpu_custom_call.1} parent=1 // pred_region
      _
    $region41: #{tpu_custom_call.1} parent=1 // pred_fallthru
      _
    // Predicated region
    $region42: #{tpu_custom_call.1} parent=1 // pred_check
      _
    $region43: #{tpu_custom_call.1} parent=1 // pred_check_branch
      %82 = sbr.rel (0) target = $region45
    $region44: #{tpu_custom_call.1} parent=1 // pred_region
      _
    $region45: #{tpu_custom_call.1} parent=1 // pred_fallthru
      _
    // Predicated region
    $region46: #{tpu_custom_call.1} parent=1 // pred_check
      _
    $region47: #{tpu_custom_call.1} parent=1 // pred_check_branch
      %84 = sbr.rel (0) target = $region49
    $region48: #{tpu_custom_call.1} parent=1 // pred_region
      _
    $region49: #{tpu_custom_call.1} parent=1 // pred_fallthru
      _
    // Predicated region
    $region50: #{tpu_custom_call.1} parent=1 // pred_check
      _
    $region51: #{tpu_custom_call.1} parent=1 // pred_check_branch
      %86 = sbr.rel (0) target = $region53
    $region52: #{tpu_custom_call.1} parent=1 // pred_region
      _
    $region53: #{tpu_custom_call.1} parent=1 // pred_fallthru
      _
    // Predicated region
    $region54: #{tpu_custom_call.1} parent=1 // pred_check
      _
    $region55: #{tpu_custom_call.1} parent=1 // pred_check_branch
      %88 = sbr.rel (0) target = $region57
    $region56: #{tpu_custom_call.1} parent=1 // pred_region
      _
    $region57: #{tpu_custom_call.1} parent=1 // pred_fallthru
      _
    // Predicated region
    $region58: #{tpu_custom_call.1} parent=1 // pred_check
      _
    $region59: #{tpu_custom_call.1} parent=1 // pred_check_branch
      %90 = sbr.rel (0) target = $region61
    $region60: #{tpu_custom_call.1} parent=1 // pred_region
      _
    $region61: #{tpu_custom_call.1} parent=1 // pred_fallthru
      _
    // Predicated region
    $region62: #{tpu_custom_call.1} parent=1 // pred_check
      _
    $region63: #{tpu_custom_call.1} parent=1 // pred_check_branch
      %92 = sbr.rel (0) target = $region65
    $region64: #{tpu_custom_call.1} parent=1 // pred_region
      _
    $region65: #{tpu_custom_call.1} parent=1 // pred_fallthru
      _
    // Predicated region
    $region66: #{tpu_custom_call.1} parent=1 // pred_check
      _
    $region67: #{tpu_custom_call.1} parent=1 // pred_check_branch
      %94 = sbr.rel (0) target = $region69
    $region68: #{tpu_custom_call.1} parent=1 // pred_region
      _
    $region69: #{tpu_custom_call.1} parent=1 // pred_fallthru
      _
    // Predicated region
    $region70: #{tpu_custom_call.1} parent=1 // pred_check
      _
    $region71: #{tpu_custom_call.1} parent=1 // pred_check_branch
      %96 = sbr.rel (0) target = $region73
    $region72: #{tpu_custom_call.1} parent=1 // pred_region
      %97 = dma.done [#allocation3], 16384
    $region73: #{tpu_custom_call.1} parent=1 // pred_fallthru
      _
    // Predicated region
    $region74: #{tpu_custom_call.1} parent=1 // pred_check
      _
    $region75: #{tpu_custom_call.1} parent=1 // pred_check_branch
      %99 = sbr.rel (0) target = $region77
    $region76: #{tpu_custom_call.1} parent=1 // pred_region
      %100 = dma.done [#allocation6], 16384
    $region77: #{tpu_custom_call.1} parent=1 // pred_fallthru
      _
    // Predicated region
    $region78: #{tpu_custom_call.1} parent=1 // pred_check
      _
    $region79: #{tpu_custom_call.1} parent=1 // pred_check_branch
      %102 = sbr.rel (0) target = $region81
    $region80: #{tpu_custom_call.1} parent=1 // pred_region
      %103 = dma.done [#allocation6], 16384
    $region81: #{tpu_custom_call.1} parent=1 // pred_fallthru
      _
    %v104 = vld [vmem:[%s0] sm:$0xf]
    %v105 = vld [vmem:[%s9] sm:$0x3]
    %v106 = vld [vmem:[%s9 + $0x2] sm:$0xf]
    %v107 = vld [vmem:[%s9 + $0x6] sm:$0x3]
    %v108 = vld [vmem:[%s9 + $0x8] sm:$0x3]
    %v109 = vld [vmem:[%s9 + $0xa] sm:$0xf]
    %v110 = vld [vmem:[%s10] sm:$0x1]
    %v111 = vld [vmem:[%s10 + $0x1] sm:$0x1]
    %v112 = vld [vmem:[%s10 + $0x2] sm:$0x1]
    %v113 = vld [vmem:[%s10 + $0x3] sm:$0x1]
    %v114 = vld [vmem:[%s1] sm:$0xff]
    %v115 = vld [vmem:[%s1 + $0x8] sm:$0xff]
    %v116 = vld [vmem:[%s1 + $0x10] sm:$0xff]
    %v117 = vld [vmem:[%s1 + $0x18] sm:$0xff]
    %v118 = vld [vmem:[%s1 + $0x20] sm:$0xff]
    %v119 = vld [vmem:[%s1 + $0x28] sm:$0xff]
    %v120 = vld [vmem:[%s1 + $0x30] sm:$0xff]
    %v121 = vld [vmem:[%s1 + $0x38] sm:$0xff]
    %v123 = vlaneseq
    %v124 = vshrl.u32 %v123, 7
    %v125 = vsub.s32 0, %v124
    %v126 = vrot.slane %v105, %v125
    %v127 = vlaneseq
    %v128 = vshrl.u32 %v127, 7
    %v129 = vsub.s32 1, %v128
    %v130 = vrot.slane %v105, %v129
    %vm133 = vcmask 261120
    %v135 = vsel %vm133, %v104, 0
    %137 = vmatprep.subr.mxu0 %v115
    %138 = vmatpush1.msra.mxu0 %v114
    %139 = vmatprep.subr.mxu0 %v117
    %140 = vmatpush1.msra.mxu0 %v116
    %141 = vmatprep.subr.mxu0 %v119
    %142 = vmatpush1.msra.mxu0 %v118
    %143 = vmatprep.subr.mxu0 %v121
    %144 = vmatpush1.msra.mxu0 %v120
    %145 = vmatprep.subr.mxu0 0.0
    %146 = vmatpush1.msra.mxu0 0.0
    %147 = vmatprep.subr.mxu0 0.0
    %148 = vmatpush1.msra.mxu0 0.0
    %149 = vmatprep.subr.mxu0 0.0
    %150 = vmatpush1.msra.mxu0 0.0
    %151 = vmatprep.subr.mxu0 0.0
    %152 = vmatpush1.msra.mxu0 0.0
    %153 = vmatprep.subr.mxu0 0.0
    %154 = vmatpush1.msra.mxu0 0.0
    %155 = vmatprep.subr.mxu0 0.0
    %156 = vmatpush1.msra.mxu0 0.0
    %157 = vmatprep.subr.mxu0 0.0
    %158 = vmatpush1.msra.mxu0 0.0
    %159 = vmatprep.subr.mxu0 0.0
    %160 = vmatpush1.msra.mxu0 0.0
    %161 = vmatprep.subr.mxu0 0.0
    %162 = vmatpush1.msra.mxu0 0.0
    %163 = vmatprep.subr.mxu0 0.0
    %164 = vmatpush1.msra.mxu0 0.0
    %165 = vmatprep.subr.mxu0 0.0
    %166 = vmatpush1.msra.mxu0 0.0
    %167 = vmatprep.subr.mxu0 0.0
    %168 = vmatpush1.msra.mxu0 0.0
    %169 = vmatprep.subr.mxu0 0.0
    %170 = vmatpush1.msra.mxu0 0.0
    %171 = vmatprep.subr.mxu0 0.0
    %172 = vmatpush1.msra.mxu0 0.0
    %173 = vmatprep.subr.mxu0 0.0
    %174 = vmatpush1.msra.mxu0 0.0
    %175 = vmatprep.subr.mxu0 0.0
    %176 = vmatpush1.msra.mxu0 0.0
    %177 = vmatprep.subr.mxu0 0.0
    %178 = vmatpush1.msra.mxu0 0.0
    %179 = vmatprep.subr.mxu0 0.0
    %180 = vmatpush1.msra.mxu0 0.0
    %181 = vmatprep.subr.mxu0 0.0
    %182 = vmatpush1.msra.mxu0 0.0
    %183 = vmatprep.subr.mxu0 0.0
    %184 = vmatpush1.msra.mxu0 0.0
    %185 = vmatprep.subr.mxu0 0.0
    %186 = vmatpush1.msra.mxu0 0.0
    %187 = vmatprep.subr.mxu0 0.0
    %188 = vmatpush1.msra.mxu0 0.0
    %189 = vmatprep.subr.mxu0 0.0
    %190 = vmatpush1.msra.mxu0 0.0
    %191 = vmatprep.subr.mxu0 0.0
    %192 = vmatpush1.msra.mxu0 0.0
    %193 = vmatprep.subr.mxu0 0.0
    %194 = vmatpush1.msra.mxu0 0.0
    %195 = vmatprep.subr.mxu0 0.0
    %196 = vmatpush1.msra.mxu0 0.0
    %197 = vmatprep.subr.mxu0 0.0
    %198 = vmatpush1.msra.mxu0 0.0
    %199 = vmatprep.subr.mxu0 0.0
    %200 = vmatpush1.msra.mxu0 0.0
    %201 = vmatprep.mubr.f32.mxu0 0.0
    %202 = vmatmul.mubr.f32.gmra.mrb[0].mxu0 %v135
    %v203 = vpop.f32.mrb[0].mxu0
    %v204 = vadd.f32 %v126, %v203
    %v205 = vpop.f32.mrb[0].mxu0
    %v206 = vadd.f32 %v130, %v205
    %207 = vdwg.mxu0
    %v208 = vmax.f32 %v204, 0.0
    %v209 = vmax.f32 %v206, 0.0
    %v210 = vld [vmem:[#allocation2] sm:$0xff]
    %v211 = vld [vmem:[#allocation2 + $0x8] sm:$0xff]
    %v212 = vld [vmem:[#allocation2 + $0x10] sm:$0xff]
    %v213 = vld [vmem:[#allocation2 + $0x18] sm:$0xff]
    %v214 = vld [vmem:[#allocation2 + $0x20] sm:$0xff]
    %v215 = vld [vmem:[#allocation2 + $0x28] sm:$0xff]
    %v216 = vld [vmem:[#allocation2 + $0x30] sm:$0xff]
    %v217 = vld [vmem:[#allocation2 + $0x38] sm:$0xff]
    %v218 = vld [vmem:[#allocation2 + $0x40] sm:$0xff]
    %v219 = vld [vmem:[#allocation2 + $0x48] sm:$0xff]
    %v220 = vld [vmem:[#allocation2 + $0x50] sm:$0xff]
    %v221 = vld [vmem:[#allocation2 + $0x58] sm:$0xff]
    %v222 = vld [vmem:[#allocation2 + $0x60] sm:$0xff]
    %v223 = vld [vmem:[#allocation2 + $0x68] sm:$0xff]
    %v224 = vld [vmem:[#allocation2 + $0x70] sm:$0xff]
    %v225 = vld [vmem:[#allocation2 + $0x78] sm:$0xff]
    %v226 = vld [vmem:[#allocation2 + $0x80] sm:$0xff]
    %v227 = vld [vmem:[#allocation2 + $0x88] sm:$0xff]
    %v228 = vld [vmem:[#allocation2 + $0x90] sm:$0xff]
    %v229 = vld [vmem:[#allocation2 + $0x98] sm:$0xff]
    %v230 = vld [vmem:[#allocation2 + $0xa0] sm:$0xff]
    %v231 = vld [vmem:[#allocation2 + $0xa8] sm:$0xff]
    %v232 = vld [vmem:[#allocation2 + $0xb0] sm:$0xff]
    %v233 = vld [vmem:[#allocation2 + $0xb8] sm:$0xff]
    %v234 = vld [vmem:[#allocation2 + $0xc0] sm:$0xff]
    %v235 = vld [vmem:[#allocation2 + $0xc8] sm:$0xff]
    %v236 = vld [vmem:[#allocation2 + $0xd0] sm:$0xff]
    %v237 = vld [vmem:[#allocation2 + $0xd8] sm:$0xff]
    %v238 = vld [vmem:[#allocation2 + $0xe0] sm:$0xff]
    %v239 = vld [vmem:[#allocation2 + $0xe8] sm:$0xff]
    %v240 = vld [vmem:[#allocation2 + $0xf0] sm:$0xff]
    %v241 = vld [vmem:[#allocation2 + $0xf8] sm:$0xff]
    %v242 = vld [vmem:[#allocation2 + $0x100] sm:$0xff]
    %v243 = vld [vmem:[#allocation2 + $0x108] sm:$0xff]
    %v244 = vld [vmem:[#allocation2 + $0x110] sm:$0xff]
    %v245 = vld [vmem:[#allocation2 + $0x118] sm:$0xff]
    %v246 = vld [vmem:[#allocation2 + $0x120] sm:$0xff]
    %v247 = vld [vmem:[#allocation2 + $0x128] sm:$0xff]
    %v248 = vld [vmem:[#allocation2 + $0x130] sm:$0xff]
    %v249 = vld [vmem:[#allocation2 + $0x138] sm:$0xff]
    %v250 = vld [vmem:[#allocation2 + $0x140] sm:$0xff]
    %v251 = vld [vmem:[#allocation2 + $0x148] sm:$0xff]
    %v252 = vld [vmem:[#allocation2 + $0x150] sm:$0xff]
    %v253 = vld [vmem:[#allocation2 + $0x158] sm:$0xff]
    %v254 = vld [vmem:[#allocation2 + $0x160] sm:$0xff]
    %v255 = vld [vmem:[#allocation2 + $0x168] sm:$0xff]
    %v256 = vld [vmem:[#allocation2 + $0x170] sm:$0xff]
    %v257 = vld [vmem:[#allocation2 + $0x178] sm:$0xff]
    %v258 = vld [vmem:[#allocation2 + $0x180] sm:$0xff]
    %v259 = vld [vmem:[#allocation2 + $0x188] sm:$0xff]
    %v260 = vld [vmem:[#allocation2 + $0x190] sm:$0xff]
    %v261 = vld [vmem:[#allocation2 + $0x198] sm:$0xff]
    %v262 = vld [vmem:[#allocation2 + $0x1a0] sm:$0xff]
    %v263 = vld [vmem:[#allocation2 + $0x1a8] sm:$0xff]
    %v264 = vld [vmem:[#allocation2 + $0x1b0] sm:$0xff]
    %v265 = vld [vmem:[#allocation2 + $0x1b8] sm:$0xff]
    %v266 = vld [vmem:[#allocation2 + $0x1c0] sm:$0xff]
    %v267 = vld [vmem:[#allocation2 + $0x1c8] sm:$0xff]
    %v268 = vld [vmem:[#allocation2 + $0x1d0] sm:$0xff]
    %v269 = vld [vmem:[#allocation2 + $0x1d8] sm:$0xff]
    %v270 = vld [vmem:[#allocation2 + $0x1e0] sm:$0xff]
    %v271 = vld [vmem:[#allocation2 + $0x1e8] sm:$0xff]
    %v272 = vld [vmem:[#allocation2 + $0x1f0] sm:$0xff]
    %v273 = vld [vmem:[#allocation2 + $0x1f8] sm:$0xff]
    %v274 = vld [vmem:[#allocation2 + $0x200] sm:$0xff]
    %v275 = vld [vmem:[#allocation2 + $0x208] sm:$0xff]
    %v276 = vld [vmem:[#allocation2 + $0x210] sm:$0xff]
    %v277 = vld [vmem:[#allocation2 + $0x218] sm:$0xff]
    %v278 = vld [vmem:[#allocation2 + $0x220] sm:$0xff]
    %v279 = vld [vmem:[#allocation2 + $0x228] sm:$0xff]
    %v280 = vld [vmem:[#allocation2 + $0x230] sm:$0xff]
    %v281 = vld [vmem:[#allocation2 + $0x238] sm:$0xff]
    %v282 = vld [vmem:[#allocation2 + $0x240] sm:$0xff]
    %v283 = vld [vmem:[#allocation2 + $0x248] sm:$0xff]
    %v284 = vld [vmem:[#allocation2 + $0x250] sm:$0xff]
    %v285 = vld [vmem:[#allocation2 + $0x258] sm:$0xff]
    %v286 = vld [vmem:[#allocation2 + $0x260] sm:$0xff]
    %v287 = vld [vmem:[#allocation2 + $0x268] sm:$0xff]
    %v288 = vld [vmem:[#allocation2 + $0x270] sm:$0xff]
    %v289 = vld [vmem:[#allocation2 + $0x278] sm:$0xff]
    %v290 = vld [vmem:[#allocation2 + $0x280] sm:$0xff]
    %v291 = vld [vmem:[#allocation2 + $0x288] sm:$0xff]
    %v292 = vld [vmem:[#allocation2 + $0x290] sm:$0xff]
    %v293 = vld [vmem:[#allocation2 + $0x298] sm:$0xff]
    %v294 = vld [vmem:[#allocation2 + $0x2a0] sm:$0xff]
    %v295 = vld [vmem:[#allocation2 + $0x2a8] sm:$0xff]
    %v296 = vld [vmem:[#allocation2 + $0x2b0] sm:$0xff]
    %v297 = vld [vmem:[#allocation2 + $0x2b8] sm:$0xff]
    %v298 = vld [vmem:[#allocation2 + $0x2c0] sm:$0xff]
    %v299 = vld [vmem:[#allocation2 + $0x2c8] sm:$0xff]
    %v300 = vld [vmem:[#allocation2 + $0x2d0] sm:$0xff]
    %v301 = vld [vmem:[#allocation2 + $0x2d8] sm:$0xff]
    %v302 = vld [vmem:[#allocation2 + $0x2e0] sm:$0xff]
    %v303 = vld [vmem:[#allocation2 + $0x2e8] sm:$0xff]
    %v304 = vld [vmem:[#allocation2 + $0x2f0] sm:$0xff]
    %v305 = vld [vmem:[#allocation2 + $0x2f8] sm:$0xff]
    %v306 = vld [vmem:[#allocation2 + $0x300] sm:$0xff]
    %v307 = vld [vmem:[#allocation2 + $0x308] sm:$0xff]
    %v308 = vld [vmem:[#allocation2 + $0x310] sm:$0xff]
    %v309 = vld [vmem:[#allocation2 + $0x318] sm:$0xff]
    %v310 = vld [vmem:[#allocation2 + $0x320] sm:$0xff]
    %v311 = vld [vmem:[#allocation2 + $0x328] sm:$0xff]
    %v312 = vld [vmem:[#allocation2 + $0x330] sm:$0xff]
    %v313 = vld [vmem:[#allocation2 + $0x338] sm:$0xff]
    %v314 = vld [vmem:[#allocation2 + $0x340] sm:$0xff]
    %v315 = vld [vmem:[#allocation2 + $0x348] sm:$0xff]
    %v316 = vld [vmem:[#allocation2 + $0x350] sm:$0xff]
    %v317 = vld [vmem:[#allocation2 + $0x358] sm:$0xff]
    %v318 = vld [vmem:[#allocation2 + $0x360] sm:$0xff]
    %v319 = vld [vmem:[#allocation2 + $0x368] sm:$0xff]
    %v320 = vld [vmem:[#allocation2 + $0x370] sm:$0xff]
    %v321 = vld [vmem:[#allocation2 + $0x378] sm:$0xff]
    %v322 = vld [vmem:[#allocation2 + $0x380] sm:$0xff]
    %v323 = vld [vmem:[#allocation2 + $0x388] sm:$0xff]
    %v324 = vld [vmem:[#allocation2 + $0x390] sm:$0xff]
    %v325 = vld [vmem:[#allocation2 + $0x398] sm:$0xff]
    %v326 = vld [vmem:[#allocation2 + $0x3a0] sm:$0xff]
    %v327 = vld [vmem:[#allocation2 + $0x3a8] sm:$0xff]
    %v328 = vld [vmem:[#allocation2 + $0x3b0] sm:$0xff]
    %v329 = vld [vmem:[#allocation2 + $0x3b8] sm:$0xff]
    %v330 = vld [vmem:[#allocation2 + $0x3c0] sm:$0xff]
    %v331 = vld [vmem:[#allocation2 + $0x3c8] sm:$0xff]
    %v332 = vld [vmem:[#allocation2 + $0x3d0] sm:$0xff]
    %v333 = vld [vmem:[#allocation2 + $0x3d8] sm:$0xff]
    %v334 = vld [vmem:[#allocation2 + $0x3e0] sm:$0xff]
    %v335 = vld [vmem:[#allocation2 + $0x3e8] sm:$0xff]
    %v336 = vld [vmem:[#allocation2 + $0x3f0] sm:$0xff]
    %v337 = vld [vmem:[#allocation2 + $0x3f8] sm:$0xff]
    %v339 = vlaneseq
    %v340 = vshrl.u32 %v339, 7
    %v341 = vsub.s32 0, %v340
    %v342 = vrot.slane %v106, %v341
    %v343 = vlaneseq
    %v344 = vshrl.u32 %v343, 7
    %v345 = vsub.s32 1, %v344
    %v346 = vrot.slane %v106, %v345
    %v347 = vlaneseq
    %v348 = vshrl.u32 %v347, 7
    %v349 = vsub.s32 2, %v348
    %v350 = vrot.slane %v106, %v349
    %v351 = vlaneseq
    %v352 = vshrl.u32 %v351, 7
    %v353 = vsub.s32 3, %v352
    %v354 = vrot.slane %v106, %v353
    %359 = vmatprep.subr.mxu0 %v211
    %360 = vmatpush1.msra.mxu0 %v210
    %361 = vmatprep.subr.mxu0 %v215
    %362 = vmatpush1.msra.mxu0 %v214
    %363 = vmatprep.subr.mxu0 %v219
    %364 = vmatpush1.msra.mxu0 %v218
    %365 = vmatprep.subr.mxu0 %v223
    %366 = vmatpush1.msra.mxu0 %v222
    %367 = vmatprep.subr.mxu0 %v227
    %368 = vmatpush1.msra.mxu0 %v226
    %369 = vmatprep.subr.mxu0 %v231
    %370 = vmatpush1.msra.mxu0 %v230
    %371 = vmatprep.subr.mxu0 %v235
    %372 = vmatpush1.msra.mxu0 %v234
    %373 = vmatprep.subr.mxu0 %v239
    %374 = vmatpush1.msra.mxu0 %v238
    %375 = vmatprep.subr.mxu0 %v243
    %376 = vmatpush1.msra.mxu0 %v242
    %377 = vmatprep.subr.mxu0 %v247
    %378 = vmatpush1.msra.mxu0 %v246
    %379 = vmatprep.subr.mxu0 %v251
    %380 = vmatpush1.msra.mxu0 %v250
    %381 = vmatprep.subr.mxu0 %v255
    %382 = vmatpush1.msra.mxu0 %v254
    %383 = vmatprep.subr.mxu0 %v259
    %384 = vmatpush1.msra.mxu0 %v258
    %385 = vmatprep.subr.mxu0 %v263
    %386 = vmatpush1.msra.mxu0 %v262
    %387 = vmatprep.subr.mxu0 %v267
    %388 = vmatpush1.msra.mxu0 %v266
    %389 = vmatprep.subr.mxu0 %v271
    %390 = vmatpush1.msra.mxu0 %v270
    %391 = vmatprep.subr.mxu0 %v275
    %392 = vmatpush1.msra.mxu0 %v274
    %393 = vmatprep.subr.mxu0 %v279
    %394 = vmatpush1.msra.mxu0 %v278
    %395 = vmatprep.subr.mxu0 %v283
    %396 = vmatpush1.msra.mxu0 %v282
    %397 = vmatprep.subr.mxu0 %v287
    %398 = vmatpush1.msra.mxu0 %v286
    %399 = vmatprep.subr.mxu0 %v291
    %400 = vmatpush1.msra.mxu0 %v290
    %401 = vmatprep.subr.mxu0 %v295
    %402 = vmatpush1.msra.mxu0 %v294
    %403 = vmatprep.subr.mxu0 %v299
    %404 = vmatpush1.msra.mxu0 %v298
    %405 = vmatprep.subr.mxu0 %v303
    %406 = vmatpush1.msra.mxu0 %v302
    %407 = vmatprep.subr.mxu0 %v307
    %408 = vmatpush1.msra.mxu0 %v306
    %409 = vmatprep.subr.mxu0 %v311
    %410 = vmatpush1.msra.mxu0 %v310
    %411 = vmatprep.subr.mxu0 %v315
    %412 = vmatpush1.msra.mxu0 %v314
    %413 = vmatprep.subr.mxu0 %v319
    %414 = vmatpush1.msra.mxu0 %v318
    %415 = vmatprep.subr.mxu0 %v323
    %416 = vmatpush1.msra.mxu0 %v322
    %417 = vmatprep.subr.mxu0 %v327
    %418 = vmatpush1.msra.mxu0 %v326
    %419 = vmatprep.subr.mxu0 %v331
    %420 = vmatpush1.msra.mxu0 %v330
    %421 = vmatprep.subr.mxu0 %v335
    %422 = vmatpush1.msra.mxu0 %v334
    %423 = vmatprep.mubr.f32.mxu0 %v209
    %424 = vmatmul.mubr.f32.gmra.mrb[0].mxu0 %v208
    %v425 = vpop.f32.mrb[0].mxu0
    %v426 = vadd.f32 %v342, %v425
    %v427 = vpop.f32.mrb[0].mxu0
    %v428 = vadd.f32 %v346, %v427
    %429 = vdwg.mxu0
    %430 = vmatprep.subr.mxu0 %v213
    %431 = vmatpush1.msra.mxu0 %v212
    %432 = vmatprep.subr.mxu0 %v217
    %433 = vmatpush1.msra.mxu0 %v216
    %434 = vmatprep.subr.mxu0 %v221
    %435 = vmatpush1.msra.mxu0 %v220
    %436 = vmatprep.subr.mxu0 %v225
    %437 = vmatpush1.msra.mxu0 %v224
    %438 = vmatprep.subr.mxu0 %v229
    %439 = vmatpush1.msra.mxu0 %v228
    %440 = vmatprep.subr.mxu0 %v233
    %441 = vmatpush1.msra.mxu0 %v232
    %442 = vmatprep.subr.mxu0 %v237
    %443 = vmatpush1.msra.mxu0 %v236
    %444 = vmatprep.subr.mxu0 %v241
    %445 = vmatpush1.msra.mxu0 %v240
    %446 = vmatprep.subr.mxu0 %v245
    %447 = vmatpush1.msra.mxu0 %v244
    %448 = vmatprep.subr.mxu0 %v249
    %449 = vmatpush1.msra.mxu0 %v248
    %450 = vmatprep.subr.mxu0 %v253
    %451 = vmatpush1.msra.mxu0 %v252
    %452 = vmatprep.subr.mxu0 %v257
    %453 = vmatpush1.msra.mxu0 %v256
    %454 = vmatprep.subr.mxu0 %v261
    %455 = vmatpush1.msra.mxu0 %v260
    %456 = vmatprep.subr.mxu0 %v265
    %457 = vmatpush1.msra.mxu0 %v264
    %458 = vmatprep.subr.mxu0 %v269
    %459 = vmatpush1.msra.mxu0 %v268
    %460 = vmatprep.subr.mxu0 %v273
    %461 = vmatpush1.msra.mxu0 %v272
    %462 = vmatprep.subr.mxu0 %v277
    %463 = vmatpush1.msra.mxu0 %v276
    %464 = vmatprep.subr.mxu0 %v281
    %465 = vmatpush1.msra.mxu0 %v280
    %466 = vmatprep.subr.mxu0 %v285
    %467 = vmatpush1.msra.mxu0 %v284
    %468 = vmatprep.subr.mxu0 %v289
    %469 = vmatpush1.msra.mxu0 %v288
    %470 = vmatprep.subr.mxu0 %v293
    %471 = vmatpush1.msra.mxu0 %v292
    %472 = vmatprep.subr.mxu0 %v297
    %473 = vmatpush1.msra.mxu0 %v296
    %474 = vmatprep.subr.mxu0 %v301
    %475 = vmatpush1.msra.mxu0 %v300
    %476 = vmatprep.subr.mxu0 %v305
    %477 = vmatpush1.msra.mxu0 %v304
    %478 = vmatprep.subr.mxu0 %v309
    %479 = vmatpush1.msra.mxu0 %v308
    %480 = vmatprep.subr.mxu0 %v313
    %481 = vmatpush1.msra.mxu0 %v312
    %482 = vmatprep.subr.mxu0 %v317
    %483 = vmatpush1.msra.mxu0 %v316
    %484 = vmatprep.subr.mxu0 %v321
    %485 = vmatpush1.msra.mxu0 %v320
    %486 = vmatprep.subr.mxu0 %v325
    %487 = vmatpush1.msra.mxu0 %v324
    %488 = vmatprep.subr.mxu0 %v329
    %489 = vmatpush1.msra.mxu0 %v328
    %490 = vmatprep.subr.mxu0 %v333
    %491 = vmatpush1.msra.mxu0 %v332
    %492 = vmatprep.subr.mxu0 %v337
    %493 = vmatpush1.msra.mxu0 %v336
    %494 = vmatprep.mubr.f32.mxu0 %v209
    %495 = vmatmul.mubr.f32.gmra.mrb[0].mxu0 %v208
    %v496 = vpop.f32.mrb[0].mxu0
    %v497 = vadd.f32 %v350, %v496
    %v498 = vpop.f32.mrb[0].mxu0
    %v499 = vadd.f32 %v354, %v498
    %500 = vdwg.mxu0
    %v501 = vmax.f32 %v426, 0.0
    %v502 = vmax.f32 %v428, 0.0
    %v503 = vmax.f32 %v497, 0.0
    %v504 = vmax.f32 %v499, 0.0
    %v505 = vld [vmem:[#allocation5] sm:$0xff]
    %v506 = vld [vmem:[#allocation5 + $0x8] sm:$0xff]
    %v507 = vld [vmem:[#allocation5 + $0x10] sm:$0xff]
    %v508 = vld [vmem:[#allocation5 + $0x18] sm:$0xff]
    %v509 = vld [vmem:[#allocation5 + $0x20] sm:$0xff]
    %v510 = vld [vmem:[#allocation5 + $0x28] sm:$0xff]
    %v511 = vld [vmem:[#allocation5 + $0x30] sm:$0xff]
    %v512 = vld [vmem:[#allocation5 + $0x38] sm:$0xff]
    %v513 = vld [vmem:[#allocation5 + $0x40] sm:$0xff]
    %v514 = vld [vmem:[#allocation5 + $0x48] sm:$0xff]
    %v515 = vld [vmem:[#allocation5 + $0x50] sm:$0xff]
    %v516 = vld [vmem:[#allocation5 + $0x58] sm:$0xff]
    %v517 = vld [vmem:[#allocation5 + $0x60] sm:$0xff]
    %v518 = vld [vmem:[#allocation5 + $0x68] sm:$0xff]
    %v519 = vld [vmem:[#allocation5 + $0x70] sm:$0xff]
    %v520 = vld [vmem:[#allocation5 + $0x78] sm:$0xff]
    %v521 = vld [vmem:[#allocation5 + $0x80] sm:$0xff]
    %v522 = vld [vmem:[#allocation5 + $0x88] sm:$0xff]
    %v523 = vld [vmem:[#allocation5 + $0x90] sm:$0xff]
    %v524 = vld [vmem:[#allocation5 + $0x98] sm:$0xff]
    %v525 = vld [vmem:[#allocation5 + $0xa0] sm:$0xff]
    %v526 = vld [vmem:[#allocation5 + $0xa8] sm:$0xff]
    %v527 = vld [vmem:[#allocation5 + $0xb0] sm:$0xff]
    %v528 = vld [vmem:[#allocation5 + $0xb8] sm:$0xff]
    %v529 = vld [vmem:[#allocation5 + $0xc0] sm:$0xff]
    %v530 = vld [vmem:[#allocation5 + $0xc8] sm:$0xff]
    %v531 = vld [vmem:[#allocation5 + $0xd0] sm:$0xff]
    %v532 = vld [vmem:[#allocation5 + $0xd8] sm:$0xff]
    %v533 = vld [vmem:[#allocation5 + $0xe0] sm:$0xff]
    %v534 = vld [vmem:[#allocation5 + $0xe8] sm:$0xff]
    %v535 = vld [vmem:[#allocation5 + $0xf0] sm:$0xff]
    %v536 = vld [vmem:[#allocation5 + $0xf8] sm:$0xff]
    %v537 = vld [vmem:[#allocation5 + $0x100] sm:$0xff]
    %v538 = vld [vmem:[#allocation5 + $0x108] sm:$0xff]
    %v539 = vld [vmem:[#allocation5 + $0x110] sm:$0xff]
    %v540 = vld [vmem:[#allocation5 + $0x118] sm:$0xff]
    %v541 = vld [vmem:[#allocation5 + $0x120] sm:$0xff]
    %v542 = vld [vmem:[#allocation5 + $0x128] sm:$0xff]
    %v543 = vld [vmem:[#allocation5 + $0x130] sm:$0xff]
    %v544 = vld [vmem:[#allocation5 + $0x138] sm:$0xff]
    %v545 = vld [vmem:[#allocation5 + $0x140] sm:$0xff]
    %v546 = vld [vmem:[#allocation5 + $0x148] sm:$0xff]
    %v547 = vld [vmem:[#allocation5 + $0x150] sm:$0xff]
    %v548 = vld [vmem:[#allocation5 + $0x158] sm:$0xff]
    %v549 = vld [vmem:[#allocation5 + $0x160] sm:$0xff]
    %v550 = vld [vmem:[#allocation5 + $0x168] sm:$0xff]
    %v551 = vld [vmem:[#allocation5 + $0x170] sm:$0xff]
    %v552 = vld [vmem:[#allocation5 + $0x178] sm:$0xff]
    %v553 = vld [vmem:[#allocation5 + $0x180] sm:$0xff]
    %v554 = vld [vmem:[#allocation5 + $0x188] sm:$0xff]
    %v555 = vld [vmem:[#allocation5 + $0x190] sm:$0xff]
    %v556 = vld [vmem:[#allocation5 + $0x198] sm:$0xff]
    %v557 = vld [vmem:[#allocation5 + $0x1a0] sm:$0xff]
    %v558 = vld [vmem:[#allocation5 + $0x1a8] sm:$0xff]
    %v559 = vld [vmem:[#allocation5 + $0x1b0] sm:$0xff]
    %v560 = vld [vmem:[#allocation5 + $0x1b8] sm:$0xff]
    %v561 = vld [vmem:[#allocation5 + $0x1c0] sm:$0xff]
    %v562 = vld [vmem:[#allocation5 + $0x1c8] sm:$0xff]
    %v563 = vld [vmem:[#allocation5 + $0x1d0] sm:$0xff]
    %v564 = vld [vmem:[#allocation5 + $0x1d8] sm:$0xff]
    %v565 = vld [vmem:[#allocation5 + $0x1e0] sm:$0xff]
    %v566 = vld [vmem:[#allocation5 + $0x1e8] sm:$0xff]
    %v567 = vld [vmem:[#allocation5 + $0x1f0] sm:$0xff]
    %v568 = vld [vmem:[#allocation5 + $0x1f8] sm:$0xff]
    %v569 = vld [vmem:[#allocation5 + $0x200] sm:$0xff]
    %v570 = vld [vmem:[#allocation5 + $0x208] sm:$0xff]
    %v571 = vld [vmem:[#allocation5 + $0x210] sm:$0xff]
    %v572 = vld [vmem:[#allocation5 + $0x218] sm:$0xff]
    %v573 = vld [vmem:[#allocation5 + $0x220] sm:$0xff]
    %v574 = vld [vmem:[#allocation5 + $0x228] sm:$0xff]
    %v575 = vld [vmem:[#allocation5 + $0x230] sm:$0xff]
    %v576 = vld [vmem:[#allocation5 + $0x238] sm:$0xff]
    %v577 = vld [vmem:[#allocation5 + $0x240] sm:$0xff]
    %v578 = vld [vmem:[#allocation5 + $0x248] sm:$0xff]
    %v579 = vld [vmem:[#allocation5 + $0x250] sm:$0xff]
    %v580 = vld [vmem:[#allocation5 + $0x258] sm:$0xff]
    %v581 = vld [vmem:[#allocation5 + $0x260] sm:$0xff]
    %v582 = vld [vmem:[#allocation5 + $0x268] sm:$0xff]
    %v583 = vld [vmem:[#allocation5 + $0x270] sm:$0xff]
    %v584 = vld [vmem:[#allocation5 + $0x278] sm:$0xff]
    %v585 = vld [vmem:[#allocation5 + $0x280] sm:$0xff]
    %v586 = vld [vmem:[#allocation5 + $0x288] sm:$0xff]
    %v587 = vld [vmem:[#allocation5 + $0x290] sm:$0xff]
    %v588 = vld [vmem:[#allocation5 + $0x298] sm:$0xff]
    %v589 = vld [vmem:[#allocation5 + $0x2a0] sm:$0xff]
    %v590 = vld [vmem:[#allocation5 + $0x2a8] sm:$0xff]
    %v591 = vld [vmem:[#allocation5 + $0x2b0] sm:$0xff]
    %v592 = vld [vmem:[#allocation5 + $0x2b8] sm:$0xff]
    %v593 = vld [vmem:[#allocation5 + $0x2c0] sm:$0xff]
    %v594 = vld [vmem:[#allocation5 + $0x2c8] sm:$0xff]
    %v595 = vld [vmem:[#allocation5 + $0x2d0] sm:$0xff]
    %v596 = vld [vmem:[#allocation5 + $0x2d8] sm:$0xff]
    %v597 = vld [vmem:[#allocation5 + $0x2e0] sm:$0xff]
    %v598 = vld [vmem:[#allocation5 + $0x2e8] sm:$0xff]
    %v599 = vld [vmem:[#allocation5 + $0x2f0] sm:$0xff]
    %v600 = vld [vmem:[#allocation5 + $0x2f8] sm:$0xff]
    %v601 = vld [vmem:[#allocation5 + $0x300] sm:$0xff]
    %v602 = vld [vmem:[#allocation5 + $0x308] sm:$0xff]
    %v603 = vld [vmem:[#allocation5 + $0x310] sm:$0xff]
    %v604 = vld [vmem:[#allocation5 + $0x318] sm:$0xff]
    %v605 = vld [vmem:[#allocation5 + $0x320] sm:$0xff]
    %v606 = vld [vmem:[#allocation5 + $0x328] sm:$0xff]
    %v607 = vld [vmem:[#allocation5 + $0x330] sm:$0xff]
    %v608 = vld [vmem:[#allocation5 + $0x338] sm:$0xff]
    %v609 = vld [vmem:[#allocation5 + $0x340] sm:$0xff]
    %v610 = vld [vmem:[#allocation5 + $0x348] sm:$0xff]
    %v611 = vld [vmem:[#allocation5 + $0x350] sm:$0xff]
    %v612 = vld [vmem:[#allocation5 + $0x358] sm:$0xff]
    %v613 = vld [vmem:[#allocation5 + $0x360] sm:$0xff]
    %v614 = vld [vmem:[#allocation5 + $0x368] sm:$0xff]
    %v615 = vld [vmem:[#allocation5 + $0x370] sm:$0xff]
    %v616 = vld [vmem:[#allocation5 + $0x378] sm:$0xff]
    %v617 = vld [vmem:[#allocation5 + $0x380] sm:$0xff]
    %v618 = vld [vmem:[#allocation5 + $0x388] sm:$0xff]
    %v619 = vld [vmem:[#allocation5 + $0x390] sm:$0xff]
    %v620 = vld [vmem:[#allocation5 + $0x398] sm:$0xff]
    %v621 = vld [vmem:[#allocation5 + $0x3a0] sm:$0xff]
    %v622 = vld [vmem:[#allocation5 + $0x3a8] sm:$0xff]
    %v623 = vld [vmem:[#allocation5 + $0x3b0] sm:$0xff]
    %v624 = vld [vmem:[#allocation5 + $0x3b8] sm:$0xff]
    %v625 = vld [vmem:[#allocation5 + $0x3c0] sm:$0xff]
    %v626 = vld [vmem:[#allocation5 + $0x3c8] sm:$0xff]
    %v627 = vld [vmem:[#allocation5 + $0x3d0] sm:$0xff]
    %v628 = vld [vmem:[#allocation5 + $0x3d8] sm:$0xff]
    %v629 = vld [vmem:[#allocation5 + $0x3e0] sm:$0xff]
    %v630 = vld [vmem:[#allocation5 + $0x3e8] sm:$0xff]
    %v631 = vld [vmem:[#allocation5 + $0x3f0] sm:$0xff]
    %v632 = vld [vmem:[#allocation5 + $0x3f8] sm:$0xff]
    %v634 = vlaneseq
    %v635 = vshrl.u32 %v634, 7
    %v636 = vsub.s32 0, %v635
    %v637 = vrot.slane %v107, %v636
    %v638 = vlaneseq
    %v639 = vshrl.u32 %v638, 7
    %v640 = vsub.s32 1, %v639
    %v641 = vrot.slane %v107, %v640
    %644 = vmatprep.subr.mxu0 %v506
    %645 = vmatpush1.msra.mxu0 %v505
    %646 = vmatprep.subr.mxu0 %v508
    %647 = vmatpush1.msra.mxu0 %v507
    %648 = vmatprep.subr.mxu0 %v510
    %649 = vmatpush1.msra.mxu0 %v509
    %650 = vmatprep.subr.mxu0 %v512
    %651 = vmatpush1.msra.mxu0 %v511
    %652 = vmatprep.subr.mxu0 %v514
    %653 = vmatpush1.msra.mxu0 %v513
    %654 = vmatprep.subr.mxu0 %v516
    %655 = vmatpush1.msra.mxu0 %v515
    %656 = vmatprep.subr.mxu0 %v518
    %657 = vmatpush1.msra.mxu0 %v517
    %658 = vmatprep.subr.mxu0 %v520
    %659 = vmatpush1.msra.mxu0 %v519
    %660 = vmatprep.subr.mxu0 %v522
    %661 = vmatpush1.msra.mxu0 %v521
    %662 = vmatprep.subr.mxu0 %v524
    %663 = vmatpush1.msra.mxu0 %v523
    %664 = vmatprep.subr.mxu0 %v526
    %665 = vmatpush1.msra.mxu0 %v525
    %666 = vmatprep.subr.mxu0 %v528
    %667 = vmatpush1.msra.mxu0 %v527
    %668 = vmatprep.subr.mxu0 %v530
    %669 = vmatpush1.msra.mxu0 %v529
    %670 = vmatprep.subr.mxu0 %v532
    %671 = vmatpush1.msra.mxu0 %v531
    %672 = vmatprep.subr.mxu0 %v534
    %673 = vmatpush1.msra.mxu0 %v533
    %674 = vmatprep.subr.mxu0 %v536
    %675 = vmatpush1.msra.mxu0 %v535
    %676 = vmatprep.subr.mxu0 %v538
    %677 = vmatpush1.msra.mxu0 %v537
    %678 = vmatprep.subr.mxu0 %v540
    %679 = vmatpush1.msra.mxu0 %v539
    %680 = vmatprep.subr.mxu0 %v542
    %681 = vmatpush1.msra.mxu0 %v541
    %682 = vmatprep.subr.mxu0 %v544
    %683 = vmatpush1.msra.mxu0 %v543
    %684 = vmatprep.subr.mxu0 %v546
    %685 = vmatpush1.msra.mxu0 %v545
    %686 = vmatprep.subr.mxu0 %v548
    %687 = vmatpush1.msra.mxu0 %v547
    %688 = vmatprep.subr.mxu0 %v550
    %689 = vmatpush1.msra.mxu0 %v549
    %690 = vmatprep.subr.mxu0 %v552
    %691 = vmatpush1.msra.mxu0 %v551
    %692 = vmatprep.subr.mxu0 %v554
    %693 = vmatpush1.msra.mxu0 %v553
    %694 = vmatprep.subr.mxu0 %v556
    %695 = vmatpush1.msra.mxu0 %v555
    %696 = vmatprep.subr.mxu0 %v558
    %697 = vmatpush1.msra.mxu0 %v557
    %698 = vmatprep.subr.mxu0 %v560
    %699 = vmatpush1.msra.mxu0 %v559
    %700 = vmatprep.subr.mxu0 %v562
    %701 = vmatpush1.msra.mxu0 %v561
    %702 = vmatprep.subr.mxu0 %v564
    %703 = vmatpush1.msra.mxu0 %v563
    %704 = vmatprep.subr.mxu0 %v566
    %705 = vmatpush1.msra.mxu0 %v565
    %706 = vmatprep.subr.mxu0 %v568
    %707 = vmatpush1.msra.mxu0 %v567
    %708 = vmatprep.mubr.f32.mxu0 %v502
    %709 = vmatmul.mubr.f32.gmra.mrb[0].mxu0 %v501
    %v710 = vpop.f32.mrb[0].mxu0
    %v711 = vadd.f32 %v637, %v710
    %v712 = vpop.f32.mrb[0].mxu0
    %v713 = vadd.f32 %v641, %v712
    %714 = vdwg.mxu0
    %715 = vmatprep.subr.mxu0 %v570
    %716 = vmatpush1.msra.mxu0 %v569
    %717 = vmatprep.subr.mxu0 %v572
    %718 = vmatpush1.msra.mxu0 %v571
    %719 = vmatprep.subr.mxu0 %v574
    %720 = vmatpush1.msra.mxu0 %v573
    %721 = vmatprep.subr.mxu0 %v576
    %722 = vmatpush1.msra.mxu0 %v575
    %723 = vmatprep.subr.mxu0 %v578
    %724 = vmatpush1.msra.mxu0 %v577
    %725 = vmatprep.subr.mxu0 %v580
    %726 = vmatpush1.msra.mxu0 %v579
    %727 = vmatprep.subr.mxu0 %v582
    %728 = vmatpush1.msra.mxu0 %v581
    %729 = vmatprep.subr.mxu0 %v584
    %730 = vmatpush1.msra.mxu0 %v583
    %731 = vmatprep.subr.mxu0 %v586
    %732 = vmatpush1.msra.mxu0 %v585
    %733 = vmatprep.subr.mxu0 %v588
    %734 = vmatpush1.msra.mxu0 %v587
    %735 = vmatprep.subr.mxu0 %v590
    %736 = vmatpush1.msra.mxu0 %v589
    %737 = vmatprep.subr.mxu0 %v592
    %738 = vmatpush1.msra.mxu0 %v591
    %739 = vmatprep.subr.mxu0 %v594
    %740 = vmatpush1.msra.mxu0 %v593
    %741 = vmatprep.subr.mxu0 %v596
    %742 = vmatpush1.msra.mxu0 %v595
    %743 = vmatprep.subr.mxu0 %v598
    %744 = vmatpush1.msra.mxu0 %v597
    %745 = vmatprep.subr.mxu0 %v600
    %746 = vmatpush1.msra.mxu0 %v599
    %747 = vmatprep.subr.mxu0 %v602
    %748 = vmatpush1.msra.mxu0 %v601
    %749 = vmatprep.subr.mxu0 %v604
    %750 = vmatpush1.msra.mxu0 %v603
    %751 = vmatprep.subr.mxu0 %v606
    %752 = vmatpush1.msra.mxu0 %v605
    %753 = vmatprep.subr.mxu0 %v608
    %754 = vmatpush1.msra.mxu0 %v607
    %755 = vmatprep.subr.mxu0 %v610
    %756 = vmatpush1.msra.mxu0 %v609
    %757 = vmatprep.subr.mxu0 %v612
    %758 = vmatpush1.msra.mxu0 %v611
    %759 = vmatprep.subr.mxu0 %v614
    %760 = vmatpush1.msra.mxu0 %v613
    %761 = vmatprep.subr.mxu0 %v616
    %762 = vmatpush1.msra.mxu0 %v615
    %763 = vmatprep.subr.mxu0 %v618
    %764 = vmatpush1.msra.mxu0 %v617
    %765 = vmatprep.subr.mxu0 %v620
    %766 = vmatpush1.msra.mxu0 %v619
    %767 = vmatprep.subr.mxu0 %v622
    %768 = vmatpush1.msra.mxu0 %v621
    %769 = vmatprep.subr.mxu0 %v624
    %770 = vmatpush1.msra.mxu0 %v623
    %771 = vmatprep.subr.mxu0 %v626
    %772 = vmatpush1.msra.mxu0 %v625
    %773 = vmatprep.subr.mxu0 %v628
    %774 = vmatpush1.msra.mxu0 %v627
    %775 = vmatprep.subr.mxu0 %v630
    %776 = vmatpush1.msra.mxu0 %v629
    %777 = vmatprep.subr.mxu0 %v632
    %778 = vmatpush1.msra.mxu0 %v631
    %779 = vmatprep.mubr.f32.mxu0 %v504
    %780 = vmatmul.mubr.f32.gmra.mrb[0].mxu0 %v503
    %v781 = vpop.f32.mrb[0].mxu0
    %v782 = vadd.f32 %v711, %v781
    %v783 = vpop.f32.mrb[0].mxu0
    %v784 = vadd.f32 %v713, %v783
    %785 = vdwg.mxu0
    %v786 = vld [vmem:[%s4] sm:$0xff]
    %v787 = vld [vmem:[%s4 + $0x8] sm:$0xff]
    %v788 = vld [vmem:[%s4 + $0x10] sm:$0xff]
    %v789 = vld [vmem:[%s4 + $0x18] sm:$0xff]
    %v790 = vld [vmem:[%s4 + $0x20] sm:$0xff]
    %v791 = vld [vmem:[%s4 + $0x28] sm:$0xff]
    %v792 = vld [vmem:[%s4 + $0x30] sm:$0xff]
    %v793 = vld [vmem:[%s4 + $0x38] sm:$0xff]
    %v794 = vld [vmem:[%s4 + $0x40] sm:$0xff]
    %v795 = vld [vmem:[%s4 + $0x48] sm:$0xff]
    %v796 = vld [vmem:[%s4 + $0x50] sm:$0xff]
    %v797 = vld [vmem:[%s4 + $0x58] sm:$0xff]
    %v798 = vld [vmem:[%s4 + $0x60] sm:$0xff]
    %v799 = vld [vmem:[%s4 + $0x68] sm:$0xff]
    %v800 = vld [vmem:[%s4 + $0x70] sm:$0xff]
    %v801 = vld [vmem:[%s4 + $0x78] sm:$0xff]
    %v802 = vld [vmem:[%s4 + $0x80] sm:$0xff]
    %v803 = vld [vmem:[%s4 + $0x88] sm:$0xff]
    %v804 = vld [vmem:[%s4 + $0x90] sm:$0xff]
    %v805 = vld [vmem:[%s4 + $0x98] sm:$0xff]
    %v806 = vld [vmem:[%s4 + $0xa0] sm:$0xff]
    %v807 = vld [vmem:[%s4 + $0xa8] sm:$0xff]
    %v808 = vld [vmem:[%s4 + $0xb0] sm:$0xff]
    %v809 = vld [vmem:[%s4 + $0xb8] sm:$0xff]
    %v810 = vld [vmem:[%s4 + $0xc0] sm:$0xff]
    %v811 = vld [vmem:[%s4 + $0xc8] sm:$0xff]
    %v812 = vld [vmem:[%s4 + $0xd0] sm:$0xff]
    %v813 = vld [vmem:[%s4 + $0xd8] sm:$0xff]
    %v814 = vld [vmem:[%s4 + $0xe0] sm:$0xff]
    %v815 = vld [vmem:[%s4 + $0xe8] sm:$0xff]
    %v816 = vld [vmem:[%s4 + $0xf0] sm:$0xff]
    %v817 = vld [vmem:[%s4 + $0xf8] sm:$0xff]
    %818 = vmatprep.subr.mxu0 0.0
    %819 = vmatpush1.msra.mxu0 %v786
    %820 = vmatprep.subr.mxu0 0.0
    %821 = vmatpush1.msra.mxu0 %v787
    %822 = vmatprep.subr.mxu0 0.0
    %823 = vmatpush1.msra.mxu0 %v788
    %824 = vmatprep.subr.mxu0 0.0
    %825 = vmatpush1.msra.mxu0 %v789
    %826 = vmatprep.subr.mxu0 0.0
    %827 = vmatpush1.msra.mxu0 %v790
    %828 = vmatprep.subr.mxu0 0.0
    %829 = vmatpush1.msra.mxu0 %v791
    %830 = vmatprep.subr.mxu0 0.0
    %831 = vmatpush1.msra.mxu0 %v792
    %832 = vmatprep.subr.mxu0 0.0
    %833 = vmatpush1.msra.mxu0 %v793
    %834 = vmatprep.subr.mxu0 0.0
    %835 = vmatpush1.msra.mxu0 %v794
    %836 = vmatprep.subr.mxu0 0.0
    %837 = vmatpush1.msra.mxu0 %v795
    %838 = vmatprep.subr.mxu0 0.0
    %839 = vmatpush1.msra.mxu0 %v796
    %840 = vmatprep.subr.mxu0 0.0
    %841 = vmatpush1.msra.mxu0 %v797
    %842 = vmatprep.subr.mxu0 0.0
    %843 = vmatpush1.msra.mxu0 %v798
    %844 = vmatprep.subr.mxu0 0.0
    %845 = vmatpush1.msra.mxu0 %v799
    %846 = vmatprep.subr.mxu0 0.0
    %847 = vmatpush1.msra.mxu0 %v800
    %848 = vmatprep.subr.mxu0 0.0
    %849 = vmatpush1.msra.mxu0 %v801
    %850 = vmatprep.subr.mxu0 0.0
    %851 = vmatpush1.msra.mxu0 %v802
    %852 = vmatprep.subr.mxu0 0.0
    %853 = vmatpush1.msra.mxu0 %v803
    %854 = vmatprep.subr.mxu0 0.0
    %855 = vmatpush1.msra.mxu0 %v804
    %856 = vmatprep.subr.mxu0 0.0
    %857 = vmatpush1.msra.mxu0 %v805
    %858 = vmatprep.subr.mxu0 0.0
    %859 = vmatpush1.msra.mxu0 %v806
    %860 = vmatprep.subr.mxu0 0.0
    %861 = vmatpush1.msra.mxu0 %v807
    %862 = vmatprep.subr.mxu0 0.0
    %863 = vmatpush1.msra.mxu0 %v808
    %864 = vmatprep.subr.mxu0 0.0
    %865 = vmatpush1.msra.mxu0 %v809
    %866 = vmatprep.subr.mxu0 0.0
    %867 = vmatpush1.msra.mxu0 %v810
    %868 = vmatprep.subr.mxu0 0.0
    %869 = vmatpush1.msra.mxu0 %v811
    %870 = vmatprep.subr.mxu0 0.0
    %871 = vmatpush1.msra.mxu0 %v812
    %872 = vmatprep.subr.mxu0 0.0
    %873 = vmatpush1.msra.mxu0 %v813
    %874 = vmatprep.subr.mxu0 0.0
    %875 = vmatpush1.msra.mxu0 %v814
    %876 = vmatprep.subr.mxu0 0.0
    %877 = vmatpush1.msra.mxu0 %v815
    %878 = vmatprep.subr.mxu0 0.0
    %879 = vmatpush1.msra.mxu0 %v816
    %880 = vmatprep.subr.mxu0 0.0
    %881 = vmatpush1.msra.mxu0 %v817
    %882 = vmatprep.mubr.f32.mxu0 %v784
    %883 = vmatmul.mubr.f32.gmra.mrb[0].mxu0 %v782
    %v884 = vpop.f32.mrb[0].mxu0
    %v885 = vadd.f32 0.0, %v884
    %v886 = vpop.f32.mrb[0].mxu0
    %887 = vdwg.mxu0
    %v888 = vlaneseq
    %v889 = vshrl.u32 %v888, 7
    %v890 = vsub.s32 0, %v889
    %v891 = vrot.slane %v110, %v890
    %v892 = vadd.f32 %v885, %v891
    %v893 = vlaneseq
    %v894 = vshrl.u32 %v893, 7
    %v895 = vsub.s32 0, %v894
    %v896 = vrot.slane %v111, %v895
    %898 = vrot.lane.b32.xlu0 %v896, 16
    %v899 = vpop.permute.xlu0 %898
    %v901 = vadd.f32 %v885, %v899
    %vm902 = vcmask 125952
    %903 = vst.msk [vmem:[#allocation8] sm:$0xf] %vm902, %v892
    %905 = vrot.lane.b32.xlu0 %v901, 112
    %v906 = vpop.permute.xlu0 %905
    %908 = vst.msk [vmem:[#allocation9] sm:$0xf] %vm902, %v906
    %v909 = vld [vmem:[%s11] sm:$0x3f]
    %v910 = vld [vmem:[%s8] sm:$0xff]
    %v911 = vld [vmem:[%s8 + $0x8] sm:$0xff]
    %v912 = vlaneseq
    %v913 = vshrl.u32 %v912, 7
    %v914 = vsub.s32 0, %v913
    %v915 = vrot.slane %v112, %v914
    %vm916 = vcmask 130048
    %v918 = vsel %vm916, %v909, 0
    %920 = vmatprep.subr.mxu0 0.0
    %921 = vmatpush1.msra.mxu0 %v910
    %922 = vmatprep.subr.mxu0 0.0
    %923 = vmatpush1.msra.mxu0 %v911
    %924 = vmatprep.subr.mxu0 0.0
    %925 = vmatpush1.msra.mxu0 0.0
    %926 = vmatprep.subr.mxu0 0.0
    %927 = vmatpush1.msra.mxu0 0.0
    %928 = vmatprep.subr.mxu0 0.0
    %929 = vmatpush1.msra.mxu0 0.0
    %930 = vmatprep.subr.mxu0 0.0
    %931 = vmatpush1.msra.mxu0 0.0
    %932 = vmatprep.subr.mxu0 0.0
    %933 = vmatpush1.msra.mxu0 0.0
    %934 = vmatprep.subr.mxu0 0.0
    %935 = vmatpush1.msra.mxu0 0.0
    %936 = vmatprep.subr.mxu0 0.0
    %937 = vmatpush1.msra.mxu0 0.0
    %938 = vmatprep.subr.mxu0 0.0
    %939 = vmatpush1.msra.mxu0 0.0
    %940 = vmatprep.subr.mxu0 0.0
    %941 = vmatpush1.msra.mxu0 0.0
    %942 = vmatprep.subr.mxu0 0.0
    %943 = vmatpush1.msra.mxu0 0.0
    %944 = vmatprep.subr.mxu0 0.0
    %945 = vmatpush1.msra.mxu0 0.0
    %946 = vmatprep.subr.mxu0 0.0
    %947 = vmatpush1.msra.mxu0 0.0
    %948 = vmatprep.subr.mxu0 0.0
    %949 = vmatpush1.msra.mxu0 0.0
    %950 = vmatprep.subr.mxu0 0.0
    %951 = vmatpush1.msra.mxu0 0.0
    %952 = vmatprep.subr.mxu0 0.0
    %953 = vmatpush1.msra.mxu0 0.0
    %954 = vmatprep.subr.mxu0 0.0
    %955 = vmatpush1.msra.mxu0 0.0
    %956 = vmatprep.subr.mxu0 0.0
    %957 = vmatpush1.msra.mxu0 0.0
    %958 = vmatprep.subr.mxu0 0.0
    %959 = vmatpush1.msra.mxu0 0.0
    %960 = vmatprep.subr.mxu0 0.0
    %961 = vmatpush1.msra.mxu0 0.0
    %962 = vmatprep.subr.mxu0 0.0
    %963 = vmatpush1.msra.mxu0 0.0
    %964 = vmatprep.subr.mxu0 0.0
    %965 = vmatpush1.msra.mxu0 0.0
    %966 = vmatprep.subr.mxu0 0.0
    %967 = vmatpush1.msra.mxu0 0.0
    %968 = vmatprep.subr.mxu0 0.0
    %969 = vmatpush1.msra.mxu0 0.0
    %970 = vmatprep.subr.mxu0 0.0
    %971 = vmatpush1.msra.mxu0 0.0
    %972 = vmatprep.subr.mxu0 0.0
    %973 = vmatpush1.msra.mxu0 0.0
    %974 = vmatprep.subr.mxu0 0.0
    %975 = vmatpush1.msra.mxu0 0.0
    %976 = vmatprep.subr.mxu0 0.0
    %977 = vmatpush1.msra.mxu0 0.0
    %978 = vmatprep.subr.mxu0 0.0
    %979 = vmatpush1.msra.mxu0 0.0
    %980 = vmatprep.subr.mxu0 0.0
    %981 = vmatpush1.msra.mxu0 0.0
    %982 = vmatprep.subr.mxu0 0.0
    %983 = vmatpush1.msra.mxu0 0.0
    %984 = vmatprep.mubr.f32.mxu0 0.0
    %985 = vmatmul.mubr.f32.gmra.mrb[0].mxu0 %v918
    %v986 = vpop.f32.mrb[0].mxu0
    %v987 = vadd.f32 %v915, %v986
    %v988 = vpop.f32.mrb[0].mxu0
    %989 = vdwg.mxu0
    %v990 = vld [vmem:[%s12] sm:$0x3f]
    %v991 = vadd.f32 %v987, %v990
    %vm992 = vcmp.gt.f32.partialorder %v991, 0.0
    %v993 = vsel %vm992, 1, 0
    %v994 = vcvt.s32.f32 %v993
    %vm995 = vcmask 128000
    %996 = vst.msk [vmem:[#allocation11] sm:$0x3f] %vm995, %v994
    %v997 = vmul.f32 %v901, 0.5
    %v998 = vmul.f32 %v997, 1.442695
    %v999 = vpow.pop %v998
    %v1000 = vld [vmem:[%s13] sm:$0xf]
    %1002 = vrot.lane.b32.xlu0 %v1000, 16
    %v1003 = vpop.permute.xlu0 %1002
    %v1005 = vmul.f32 %v999, %v1003
    %v1006 = vld [vmem:[%s14] sm:$0xff]
    %v1007 = vld [vmem:[%s14 + $0x8] sm:$0xff]
    %v1008 = vld [vmem:[%s14 + $0x10] sm:$0xff]
    %v1009 = vld [vmem:[%s15] sm:$0xff]
    %v1010 = vld [vmem:[%s15 + $0x8] sm:$0xff]
    %v1011 = vld [vmem:[%s15 + $0x10] sm:$0xff]
    %v1012 = vld [vmem:[%s16] sm:$0xf]
    %1014 = vrot.lane.b32.xlu0 %v1005, 112
    %v1015 = vpop.permute.xlu0 %1014
    %vm1016 = vcmask 31744
    %v1018 = vsel %vm1016, %v1006, 0
    %v1021 = vsel %vm1016, %v1007, 0
    %v1024 = vsel %vm1016, %v1008, 0
    %vm1026 = vcmask 1043456
    %v1027 = vsel %vm1026, %v1015, 0
    %1029 = vmatprep.subr.mxu0 0.0
    %1030 = vmatpush1.msra.mxu0 %v1027
    %1031 = vmatprep.subr.mxu0 0.0
    %1032 = vmatpush1.msra.mxu0 0.0
    %1033 = vmatprep.subr.mxu0 0.0
    %1034 = vmatpush1.msra.mxu0 0.0
    %1035 = vmatprep.subr.mxu0 0.0
    %1036 = vmatpush1.msra.mxu0 0.0
    %1037 = vmatprep.subr.mxu0 0.0
    %1038 = vmatpush1.msra.mxu0 0.0
    %1039 = vmatprep.subr.mxu0 0.0
    %1040 = vmatpush1.msra.mxu0 0.0
    %1041 = vmatprep.subr.mxu0 0.0
    %1042 = vmatpush1.msra.mxu0 0.0
    %1043 = vmatprep.subr.mxu0 0.0
    %1044 = vmatpush1.msra.mxu0 0.0
    %1045 = vmatprep.subr.mxu0 0.0
    %1046 = vmatpush1.msra.mxu0 0.0
    %1047 = vmatprep.subr.mxu0 0.0
    %1048 = vmatpush1.msra.mxu0 0.0
    %1049 = vmatprep.subr.mxu0 0.0
    %1050 = vmatpush1.msra.mxu0 0.0
    %1051 = vmatprep.subr.mxu0 0.0
    %1052 = vmatpush1.msra.mxu0 0.0
    %1053 = vmatprep.subr.mxu0 0.0
    %1054 = vmatpush1.msra.mxu0 0.0
    %1055 = vmatprep.subr.mxu0 0.0
    %1056 = vmatpush1.msra.mxu0 0.0
    %1057 = vmatprep.subr.mxu0 0.0
    %1058 = vmatpush1.msra.mxu0 0.0
    %1059 = vmatprep.subr.mxu0 0.0
    %1060 = vmatpush1.msra.mxu0 0.0
    %1061 = vmatprep.subr.mxu0 0.0
    %1062 = vmatpush1.msra.mxu0 0.0
    %1063 = vmatprep.subr.mxu0 0.0
    %1064 = vmatpush1.msra.mxu0 0.0
    %1065 = vmatprep.subr.mxu0 0.0
    %1066 = vmatpush1.msra.mxu0 0.0
    %1067 = vmatprep.subr.mxu0 0.0
    %1068 = vmatpush1.msra.mxu0 0.0
    %1069 = vmatprep.subr.mxu0 0.0
    %1070 = vmatpush1.msra.mxu0 0.0
    %1071 = vmatprep.subr.mxu0 0.0
    %1072 = vmatpush1.msra.mxu0 0.0
    %1073 = vmatprep.subr.mxu0 0.0
    %1074 = vmatpush1.msra.mxu0 0.0
    %1075 = vmatprep.subr.mxu0 0.0
    %1076 = vmatpush1.msra.mxu0 0.0
    %1077 = vmatprep.subr.mxu0 0.0
    %1078 = vmatpush1.msra.mxu0 0.0
    %1079 = vmatprep.subr.mxu0 0.0
    %1080 = vmatpush1.msra.mxu0 0.0
    %1081 = vmatprep.subr.mxu0 0.0
    %1082 = vmatpush1.msra.mxu0 0.0
    %1083 = vmatprep.subr.mxu0 0.0
    %1084 = vmatpush1.msra.mxu0 0.0
    %1085 = vmatprep.subr.mxu0 0.0
    %1086 = vmatpush1.msra.mxu0 0.0
    %1087 = vmatprep.subr.mxu0 0.0
    %1088 = vmatpush1.msra.mxu0 0.0
    %1089 = vmatprep.subr.mxu0 0.0
    %1090 = vmatpush1.msra.mxu0 0.0
    %1091 = vmatprep.subr.mxu0 0.0
    %1092 = vmatpush1.msra.mxu0 0.0
    %1093 = vmatprep.mubr.f32.mxu0 0.0
    %1094 = vmatmul.mubr.f32.gmra.mrb[0].mxu0 %v1018
    %v1095 = vpop.f32.mrb[0].mxu0
    %v1096 = vadd.f32 0.0, %v1095
    %v1097 = vpop.f32.mrb[0].mxu0
    %1098 = vmatprep.mubr.f32.mxu0 0.0
    %1099 = vmatmul.mubr.f32.gmra.mrb[0].mxu0 %v1021
    %v1100 = vpop.f32.mrb[0].mxu0
    %v1101 = vadd.f32 0.0, %v1100
    %v1102 = vpop.f32.mrb[0].mxu0
    %1103 = vmatprep.mubr.f32.mxu0 0.0
    %1104 = vmatmul.mubr.f32.gmra.mrb[0].mxu0 %v1024
    %v1105 = vpop.f32.mrb[0].mxu0
    %v1106 = vadd.f32 0.0, %v1105
    %v1107 = vpop.f32.mrb[0].mxu0
    %1108 = vdwg.mxu0
    %vm1109 = vcmask 48128
    %v1111 = vsel %vm1109, %v1009, 0
    %v1114 = vsel %vm1109, %v1010, 0
    %v1117 = vsel %vm1109, %v1011, 0
    %vm1119 = vcmask 1045504
    %v1121 = vsel %vm1119, %v994, 0
    %1123 = vmatprep.subr.mxu0 0.0
    %1124 = vmatpush1.msra.mxu0 %v1121
    %1125 = vmatprep.subr.mxu0 0.0
    %1126 = vmatpush1.msra.mxu0 0.0
    %1127 = vmatprep.subr.mxu0 0.0
    %1128 = vmatpush1.msra.mxu0 0.0
    %1129 = vmatprep.subr.mxu0 0.0
    %1130 = vmatpush1.msra.mxu0 0.0
    %1131 = vmatprep.subr.mxu0 0.0
    %1132 = vmatpush1.msra.mxu0 0.0
    %1133 = vmatprep.subr.mxu0 0.0
    %1134 = vmatpush1.msra.mxu0 0.0
    %1135 = vmatprep.subr.mxu0 0.0
    %1136 = vmatpush1.msra.mxu0 0.0
    %1137 = vmatprep.subr.mxu0 0.0
    %1138 = vmatpush1.msra.mxu0 0.0
    %1139 = vmatprep.subr.mxu0 0.0
    %1140 = vmatpush1.msra.mxu0 0.0
    %1141 = vmatprep.subr.mxu0 0.0
    %1142 = vmatpush1.msra.mxu0 0.0
    %1143 = vmatprep.subr.mxu0 0.0
    %1144 = vmatpush1.msra.mxu0 0.0
    %1145 = vmatprep.subr.mxu0 0.0
    %1146 = vmatpush1.msra.mxu0 0.0
    %1147 = vmatprep.subr.mxu0 0.0
    %1148 = vmatpush1.msra.mxu0 0.0
    %1149 = vmatprep.subr.mxu0 0.0
    %1150 = vmatpush1.msra.mxu0 0.0
    %1151 = vmatprep.subr.mxu0 0.0
    %1152 = vmatpush1.msra.mxu0 0.0
    %1153 = vmatprep.subr.mxu0 0.0
    %1154 = vmatpush1.msra.mxu0 0.0
    %1155 = vmatprep.subr.mxu0 0.0
    %1156 = vmatpush1.msra.mxu0 0.0
    %1157 = vmatprep.subr.mxu0 0.0
    %1158 = vmatpush1.msra.mxu0 0.0
    %1159 = vmatprep.subr.mxu0 0.0
    %1160 = vmatpush1.msra.mxu0 0.0
    %1161 = vmatprep.subr.mxu0 0.0
    %1162 = vmatpush1.msra.mxu0 0.0
    %1163 = vmatprep.subr.mxu0 0.0
    %1164 = vmatpush1.msra.mxu0 0.0
    %1165 = vmatprep.subr.mxu0 0.0
    %1166 = vmatpush1.msra.mxu0 0.0
    %1167 = vmatprep.subr.mxu0 0.0
    %1168 = vmatpush1.msra.mxu0 0.0
    %1169 = vmatprep.subr.mxu0 0.0
    %1170 = vmatpush1.msra.mxu0 0.0
    %1171 = vmatprep.subr.mxu0 0.0
    %1172 = vmatpush1.msra.mxu0 0.0
    %1173 = vmatprep.subr.mxu0 0.0
    %1174 = vmatpush1.msra.mxu0 0.0
    %1175 = vmatprep.subr.mxu0 0.0
    %1176 = vmatpush1.msra.mxu0 0.0
    %1177 = vmatprep.subr.mxu0 0.0
    %1178 = vmatpush1.msra.mxu0 0.0
    %1179 = vmatprep.subr.mxu0 0.0
    %1180 = vmatpush1.msra.mxu0 0.0
    %1181 = vmatprep.subr.mxu0 0.0
    %1182 = vmatpush1.msra.mxu0 0.0
    %1183 = vmatprep.subr.mxu0 0.0
    %1184 = vmatpush1.msra.mxu0 0.0
    %1185 = vmatprep.subr.mxu0 0.0
    %1186 = vmatpush1.msra.mxu0 0.0
    %1187 = vmatprep.mubr.f32.mxu0 0.0
    %1188 = vmatmul.mubr.f32.gmra.mrb[0].mxu0 %v1111
    %v1189 = vpop.f32.mrb[0].mxu0
    %v1190 = vadd.f32 0.0, %v1189
    %v1191 = vpop.f32.mrb[0].mxu0
    %1192 = vmatprep.mubr.f32.mxu0 0.0
    %1193 = vmatmul.mubr.f32.gmra.mrb[0].mxu0 %v1114
    %v1194 = vpop.f32.mrb[0].mxu0
    %v1195 = vadd.f32 0.0, %v1194
    %v1196 = vpop.f32.mrb[0].mxu0
    %1197 = vmatprep.mubr.f32.mxu0 0.0
    %1198 = vmatmul.mubr.f32.gmra.mrb[0].mxu0 %v1117
    %v1199 = vpop.f32.mrb[0].mxu0
    %v1200 = vadd.f32 0.0, %v1199
    %v1201 = vpop.f32.mrb[0].mxu0
    %1202 = vdwg.mxu0
    %v1203 = vmul.f32 %v1190, %v1096
    %v1204 = vmul.f32 %v1195, %v1101
    %v1205 = vmul.f32 %v1200, %v1106
    %v1207 = vsel %vm1026, %v892, 0
    %1209 = vmatprep.subr.mxu0 0.0
    %1210 = vmatpush1.msra.mxu0 %v1207
    %1211 = vmatprep.subr.mxu0 0.0
    %1212 = vmatpush1.msra.mxu0 0.0
    %1213 = vmatprep.subr.mxu0 0.0
    %1214 = vmatpush1.msra.mxu0 0.0
    %1215 = vmatprep.subr.mxu0 0.0
    %1216 = vmatpush1.msra.mxu0 0.0
    %1217 = vmatprep.subr.mxu0 0.0
    %1218 = vmatpush1.msra.mxu0 0.0
    %1219 = vmatprep.subr.mxu0 0.0
    %1220 = vmatpush1.msra.mxu0 0.0
    %1221 = vmatprep.subr.mxu0 0.0
    %1222 = vmatpush1.msra.mxu0 0.0
    %1223 = vmatprep.subr.mxu0 0.0
    %1224 = vmatpush1.msra.mxu0 0.0
    %1225 = vmatprep.subr.mxu0 0.0
    %1226 = vmatpush1.msra.mxu0 0.0
    %1227 = vmatprep.subr.mxu0 0.0
    %1228 = vmatpush1.msra.mxu0 0.0
    %1229 = vmatprep.subr.mxu0 0.0
    %1230 = vmatpush1.msra.mxu0 0.0
    %1231 = vmatprep.subr.mxu0 0.0
    %1232 = vmatpush1.msra.mxu0 0.0
    %1233 = vmatprep.subr.mxu0 0.0
    %1234 = vmatpush1.msra.mxu0 0.0
    %1235 = vmatprep.subr.mxu0 0.0
    %1236 = vmatpush1.msra.mxu0 0.0
    %1237 = vmatprep.subr.mxu0 0.0
    %1238 = vmatpush1.msra.mxu0 0.0
    %1239 = vmatprep.subr.mxu0 0.0
    %1240 = vmatpush1.msra.mxu0 0.0
    %1241 = vmatprep.subr.mxu0 0.0
    %1242 = vmatpush1.msra.mxu0 0.0
    %1243 = vmatprep.subr.mxu0 0.0
    %1244 = vmatpush1.msra.mxu0 0.0
    %1245 = vmatprep.subr.mxu0 0.0
    %1246 = vmatpush1.msra.mxu0 0.0
    %1247 = vmatprep.subr.mxu0 0.0
    %1248 = vmatpush1.msra.mxu0 0.0
    %1249 = vmatprep.subr.mxu0 0.0
    %1250 = vmatpush1.msra.mxu0 0.0
    %1251 = vmatprep.subr.mxu0 0.0
    %1252 = vmatpush1.msra.mxu0 0.0
    %1253 = vmatprep.subr.mxu0 0.0
    %1254 = vmatpush1.msra.mxu0 0.0
    %1255 = vmatprep.subr.mxu0 0.0
    %1256 = vmatpush1.msra.mxu0 0.0
    %1257 = vmatprep.subr.mxu0 0.0
    %1258 = vmatpush1.msra.mxu0 0.0
    %1259 = vmatprep.subr.mxu0 0.0
    %1260 = vmatpush1.msra.mxu0 0.0
    %1261 = vmatprep.subr.mxu0 0.0
    %1262 = vmatpush1.msra.mxu0 0.0
    %1263 = vmatprep.subr.mxu0 0.0
    %1264 = vmatpush1.msra.mxu0 0.0
    %1265 = vmatprep.subr.mxu0 0.0
    %1266 = vmatpush1.msra.mxu0 0.0
    %1267 = vmatprep.subr.mxu0 0.0
    %1268 = vmatpush1.msra.mxu0 0.0
    %1269 = vmatprep.subr.mxu0 0.0
    %1270 = vmatpush1.msra.mxu0 0.0
    %1271 = vmatprep.subr.mxu0 0.0
    %1272 = vmatpush1.msra.mxu0 0.0
    %1273 = vmatprep.mubr.f32.mxu0 0.0
    %1274 = vmatmul.mubr.f32.gmra.mrb[0].mxu0 %v1018
    %v1275 = vpop.f32.mrb[0].mxu0
    %v1276 = vadd.f32 %v1203, %v1275
    %v1277 = vpop.f32.mrb[0].mxu0
    %1278 = vmatprep.mubr.f32.mxu0 0.0
    %1279 = vmatmul.mubr.f32.gmra.mrb[0].mxu0 %v1021
    %v1280 = vpop.f32.mrb[0].mxu0
    %v1281 = vadd.f32 %v1204, %v1280
    %v1282 = vpop.f32.mrb[0].mxu0
    %1283 = vmatprep.mubr.f32.mxu0 0.0
    %1284 = vmatmul.mubr.f32.gmra.mrb[0].mxu0 %v1024
    %v1285 = vpop.f32.mrb[0].mxu0
    %v1286 = vadd.f32 %v1205, %v1285
    %v1287 = vpop.f32.mrb[0].mxu0
    %1288 = vdwg.mxu0
    %v1289 = vld [vmem:[%s5] sm:$0xff]
    %v1290 = vld [vmem:[%s5 + $0x8] sm:$0xff]
    %v1291 = vld [vmem:[%s5 + $0x10] sm:$0xff]
    %v1292 = vld [vmem:[%s5 + $0x18] sm:$0xff]
    %v1293 = vld [vmem:[%s5 + $0x20] sm:$0xff]
    %v1294 = vld [vmem:[%s5 + $0x28] sm:$0xff]
    %v1295 = vld [vmem:[%s5 + $0x30] sm:$0xff]
    %v1296 = vld [vmem:[%s5 + $0x38] sm:$0xff]
    %v1297 = vld [vmem:[%s5 + $0x40] sm:$0xff]
    %v1298 = vld [vmem:[%s5 + $0x48] sm:$0xff]
    %v1299 = vld [vmem:[%s5 + $0x50] sm:$0xff]
    %v1300 = vld [vmem:[%s5 + $0x58] sm:$0xff]
    %1301 = vmatprep.subr.mxu0 %v1290
    %1302 = vmatpush1.msra.mxu0 %v1289
    %1303 = vmatprep.subr.mxu0 %v1292
    %1304 = vmatpush1.msra.mxu0 %v1291
    %1305 = vmatprep.subr.mxu0 %v1294
    %1306 = vmatpush1.msra.mxu0 %v1293
    %1307 = vmatprep.subr.mxu0 %v1296
    %1308 = vmatpush1.msra.mxu0 %v1295
    %1309 = vmatprep.subr.mxu0 0.0
    %1310 = vmatpush1.msra.mxu0 0.0
    %1311 = vmatprep.subr.mxu0 0.0
    %1312 = vmatpush1.msra.mxu0 0.0
    %1313 = vmatprep.subr.mxu0 0.0
    %1314 = vmatpush1.msra.mxu0 0.0
    %1315 = vmatprep.subr.mxu0 0.0
    %1316 = vmatpush1.msra.mxu0 0.0
    %1317 = vmatprep.subr.mxu0 0.0
    %1318 = vmatpush1.msra.mxu0 0.0
    %1319 = vmatprep.subr.mxu0 0.0
    %1320 = vmatpush1.msra.mxu0 0.0
    %1321 = vmatprep.subr.mxu0 0.0
    %1322 = vmatpush1.msra.mxu0 0.0
    %1323 = vmatprep.subr.mxu0 0.0
    %1324 = vmatpush1.msra.mxu0 0.0
    %1325 = vmatprep.subr.mxu0 0.0
    %1326 = vmatpush1.msra.mxu0 0.0
    %1327 = vmatprep.subr.mxu0 0.0
    %1328 = vmatpush1.msra.mxu0 0.0
    %1329 = vmatprep.subr.mxu0 0.0
    %1330 = vmatpush1.msra.mxu0 0.0
    %1331 = vmatprep.subr.mxu0 0.0
    %1332 = vmatpush1.msra.mxu0 0.0
    %1333 = vmatprep.subr.mxu0 0.0
    %1334 = vmatpush1.msra.mxu0 0.0
    %1335 = vmatprep.subr.mxu0 0.0
    %1336 = vmatpush1.msra.mxu0 0.0
    %1337 = vmatprep.subr.mxu0 0.0
    %1338 = vmatpush1.msra.mxu0 0.0
    %1339 = vmatprep.subr.mxu0 0.0
    %1340 = vmatpush1.msra.mxu0 0.0
    %1341 = vmatprep.subr.mxu0 0.0
    %1342 = vmatpush1.msra.mxu0 0.0
    %1343 = vmatprep.subr.mxu0 0.0
    %1344 = vmatpush1.msra.mxu0 0.0
    %1345 = vmatprep.subr.mxu0 0.0
    %1346 = vmatpush1.msra.mxu0 0.0
    %1347 = vmatprep.subr.mxu0 0.0
    %1348 = vmatpush1.msra.mxu0 0.0
    %1349 = vmatprep.subr.mxu0 0.0
    %1350 = vmatpush1.msra.mxu0 0.0
    %1351 = vmatprep.subr.mxu0 0.0
    %1352 = vmatpush1.msra.mxu0 0.0
    %1353 = vmatprep.subr.mxu0 0.0
    %1354 = vmatpush1.msra.mxu0 0.0
    %1355 = vmatprep.subr.mxu0 0.0
    %1356 = vmatpush1.msra.mxu0 0.0
    %1357 = vmatprep.subr.mxu0 0.0
    %1358 = vmatpush1.msra.mxu0 0.0
    %1359 = vmatprep.subr.mxu0 0.0
    %1360 = vmatpush1.msra.mxu0 0.0
    %1361 = vmatprep.subr.mxu0 0.0
    %1362 = vmatpush1.msra.mxu0 0.0
    %1363 = vmatprep.subr.mxu0 0.0
    %1364 = vmatpush1.msra.mxu0 0.0
    %1365 = vmatprep.mubr.f32.mxu0 0.0
    %1366 = vmatmul.mubr.f32.gmra.mrb[0].mxu0 %v135
    %v1367 = vpop.f32.mrb[0].mxu0
    %v1368 = vadd.f32 0.0, %v1367
    %v1369 = vpop.f32.mrb[0].mxu0
    %v1370 = vadd.f32 0.0, %v1369
    %1371 = vdwg.mxu0
    %v1373 = vsel %vm916, %v1276, 0
    %v1376 = vsel %vm916, %v1281, 0
    %v1379 = vsel %vm916, %v1286, 0
    %1381 = vmatprep.subr.mxu0 %v1298
    %1382 = vmatpush1.msra.mxu0 %v1297
    %1383 = vmatprep.subr.mxu0 %v1300
    %1384 = vmatpush1.msra.mxu0 %v1299
    %1385 = vmatprep.subr.mxu0 0.0
    %1386 = vmatpush1.msra.mxu0 0.0
    %1387 = vmatprep.subr.mxu0 0.0
    %1388 = vmatpush1.msra.mxu0 0.0
    %1389 = vmatprep.subr.mxu0 0.0
    %1390 = vmatpush1.msra.mxu0 0.0
    %1391 = vmatprep.subr.mxu0 0.0
    %1392 = vmatpush1.msra.mxu0 0.0
    %1393 = vmatprep.subr.mxu0 0.0
    %1394 = vmatpush1.msra.mxu0 0.0
    %1395 = vmatprep.subr.mxu0 0.0
    %1396 = vmatpush1.msra.mxu0 0.0
    %1397 = vmatprep.subr.mxu0 0.0
    %1398 = vmatpush1.msra.mxu0 0.0
    %1399 = vmatprep.subr.mxu0 0.0
    %1400 = vmatpush1.msra.mxu0 0.0
    %1401 = vmatprep.subr.mxu0 0.0
    %1402 = vmatpush1.msra.mxu0 0.0
    %1403 = vmatprep.subr.mxu0 0.0
    %1404 = vmatpush1.msra.mxu0 0.0
    %1405 = vmatprep.subr.mxu0 0.0
    %1406 = vmatpush1.msra.mxu0 0.0
    %1407 = vmatprep.subr.mxu0 0.0
    %1408 = vmatpush1.msra.mxu0 0.0
    %1409 = vmatprep.subr.mxu0 0.0
    %1410 = vmatpush1.msra.mxu0 0.0
    %1411 = vmatprep.subr.mxu0 0.0
    %1412 = vmatpush1.msra.mxu0 0.0
    %1413 = vmatprep.subr.mxu0 0.0
    %1414 = vmatpush1.msra.mxu0 0.0
    %1415 = vmatprep.subr.mxu0 0.0
    %1416 = vmatpush1.msra.mxu0 0.0
    %1417 = vmatprep.subr.mxu0 0.0
    %1418 = vmatpush1.msra.mxu0 0.0
    %1419 = vmatprep.subr.mxu0 0.0
    %1420 = vmatpush1.msra.mxu0 0.0
    %1421 = vmatprep.subr.mxu0 0.0
    %1422 = vmatpush1.msra.mxu0 0.0
    %1423 = vmatprep.subr.mxu0 0.0
    %1424 = vmatpush1.msra.mxu0 0.0
    %1425 = vmatprep.subr.mxu0 0.0
    %1426 = vmatpush1.msra.mxu0 0.0
    %1427 = vmatprep.subr.mxu0 0.0
    %1428 = vmatpush1.msra.mxu0 0.0
    %1429 = vmatprep.subr.mxu0 0.0
    %1430 = vmatpush1.msra.mxu0 0.0
    %1431 = vmatprep.subr.mxu0 0.0
    %1432 = vmatpush1.msra.mxu0 0.0
    %1433 = vmatprep.subr.mxu0 0.0
    %1434 = vmatpush1.msra.mxu0 0.0
    %1435 = vmatprep.subr.mxu0 0.0
    %1436 = vmatpush1.msra.mxu0 0.0
    %1437 = vmatprep.subr.mxu0 0.0
    %1438 = vmatpush1.msra.mxu0 0.0
    %1439 = vmatprep.subr.mxu0 0.0
    %1440 = vmatpush1.msra.mxu0 0.0
    %1441 = vmatprep.subr.mxu0 0.0
    %1442 = vmatpush1.msra.mxu0 0.0
    %1443 = vmatprep.subr.mxu0 0.0
    %1444 = vmatpush1.msra.mxu0 0.0
    %1445 = vmatprep.mubr.f32.mxu0 0.0
    %1446 = vmatmul.mubr.f32.gmra.mrb[0].mxu0 %v1373
    %v1447 = vpop.f32.mrb[0].mxu0
    %v1448 = vadd.f32 0.0, %v1447
    %v1449 = vpop.f32.mrb[0].mxu0
    %v1450 = vadd.f32 0.0, %v1449
    %1451 = vmatprep.mubr.f32.mxu0 0.0
    %1452 = vmatmul.mubr.f32.gmra.mrb[0].mxu0 %v1376
    %v1453 = vpop.f32.mrb[0].mxu0
    %v1454 = vadd.f32 0.0, %v1453
    %v1455 = vpop.f32.mrb[0].mxu0
    %v1456 = vadd.f32 0.0, %v1455
    %1457 = vmatprep.mubr.f32.mxu0 0.0
    %1458 = vmatmul.mubr.f32.gmra.mrb[0].mxu0 %v1379
    %v1459 = vpop.f32.mrb[0].mxu0
    %v1460 = vadd.f32 0.0, %v1459
    %v1461 = vpop.f32.mrb[0].mxu0
    %v1462 = vadd.f32 0.0, %v1461
    %1463 = vdwg.mxu0
    %v1465 = vsel %vm1026, %v1368, 0
    %v1468 = vsel %vm1026, %v1370, 0
    %1470 = vmatprep.subr.mxu0 %v1468
    %1471 = vmatpush1.msra.mxu0 %v1465
    %1472 = vmatprep.subr.mxu0 0.0
    %1473 = vmatpush1.msra.mxu0 0.0
    %1474 = vmatprep.subr.mxu0 0.0
    %1475 = vmatpush1.msra.mxu0 0.0
    %1476 = vmatprep.subr.mxu0 0.0
    %1477 = vmatpush1.msra.mxu0 0.0
    %1478 = vmatprep.subr.mxu0 0.0
    %1479 = vmatpush1.msra.mxu0 0.0
    %1480 = vmatprep.subr.mxu0 0.0
    %1481 = vmatpush1.msra.mxu0 0.0
    %1482 = vmatprep.subr.mxu0 0.0
    %1483 = vmatpush1.msra.mxu0 0.0
    %1484 = vmatprep.subr.mxu0 0.0
    %1485 = vmatpush1.msra.mxu0 0.0
    %1486 = vmatprep.subr.mxu0 0.0
    %1487 = vmatpush1.msra.mxu0 0.0
    %1488 = vmatprep.subr.mxu0 0.0
    %1489 = vmatpush1.msra.mxu0 0.0
    %1490 = vmatprep.subr.mxu0 0.0
    %1491 = vmatpush1.msra.mxu0 0.0
    %1492 = vmatprep.subr.mxu0 0.0
    %1493 = vmatpush1.msra.mxu0 0.0
    %1494 = vmatprep.subr.mxu0 0.0
    %1495 = vmatpush1.msra.mxu0 0.0
    %1496 = vmatprep.subr.mxu0 0.0
    %1497 = vmatpush1.msra.mxu0 0.0
    %1498 = vmatprep.subr.mxu0 0.0
    %1499 = vmatpush1.msra.mxu0 0.0
    %1500 = vmatprep.subr.mxu0 0.0
    %1501 = vmatpush1.msra.mxu0 0.0
    %1502 = vmatprep.subr.mxu0 0.0
    %1503 = vmatpush1.msra.mxu0 0.0
    %1504 = vmatprep.subr.mxu0 0.0
    %1505 = vmatpush1.msra.mxu0 0.0
    %1506 = vmatprep.subr.mxu0 0.0
    %1507 = vmatpush1.msra.mxu0 0.0
    %1508 = vmatprep.subr.mxu0 0.0
    %1509 = vmatpush1.msra.mxu0 0.0
    %1510 = vmatprep.subr.mxu0 0.0
    %1511 = vmatpush1.msra.mxu0 0.0
    %1512 = vmatprep.subr.mxu0 0.0
    %1513 = vmatpush1.msra.mxu0 0.0
    %1514 = vmatprep.subr.mxu0 0.0
    %1515 = vmatpush1.msra.mxu0 0.0
    %1516 = vmatprep.subr.mxu0 0.0
    %1517 = vmatpush1.msra.mxu0 0.0
    %1518 = vmatprep.subr.mxu0 0.0
    %1519 = vmatpush1.msra.mxu0 0.0
    %1520 = vmatprep.subr.mxu0 0.0
    %1521 = vmatpush1.msra.mxu0 0.0
    %1522 = vmatprep.subr.mxu0 0.0
    %1523 = vmatpush1.msra.mxu0 0.0
    %1524 = vmatprep.subr.mxu0 0.0
    %1525 = vmatpush1.msra.mxu0 0.0
    %1526 = vmatprep.subr.mxu0 0.0
    %1527 = vmatpush1.msra.mxu0 0.0
    %1528 = vmatprep.subr.mxu0 0.0
    %1529 = vmatpush1.msra.mxu0 0.0
    %1530 = vmatprep.subr.mxu0 0.0
    %1531 = vmatpush1.msra.mxu0 0.0
    %1532 = vmatprep.subr.mxu0 0.0
    %1533 = vmatpush1.msra.mxu0 0.0
    %1534 = vmatprep.mubr.f32.mxu0 0.0
    %1535 = vmatmul.mubr.f32.gmra.mrb[0].mxu0 %v1018
    %v1536 = vpop.f32.mrb[0].mxu0
    %v1537 = vadd.f32 %v1448, %v1536
    %v1538 = vpop.f32.mrb[0].mxu0
    %v1539 = vadd.f32 %v1450, %v1538
    %1540 = vmatprep.mubr.f32.mxu0 0.0
    %1541 = vmatmul.mubr.f32.gmra.mrb[0].mxu0 %v1021
    %v1542 = vpop.f32.mrb[0].mxu0
    %v1543 = vadd.f32 %v1454, %v1542
    %v1544 = vpop.f32.mrb[0].mxu0
    %v1545 = vadd.f32 %v1456, %v1544
    %1546 = vmatprep.mubr.f32.mxu0 0.0
    %1547 = vmatmul.mubr.f32.gmra.mrb[0].mxu0 %v1024
    %v1548 = vpop.f32.mrb[0].mxu0
    %v1549 = vadd.f32 %v1460, %v1548
    %v1550 = vpop.f32.mrb[0].mxu0
    %v1551 = vadd.f32 %v1462, %v1550
    %1552 = vdwg.mxu0
    %v1554 = vlaneseq
    %v1555 = vshrl.u32 %v1554, 7
    %v1556 = vsub.s32 0, %v1555
    %v1557 = vrot.slane %v108, %v1556
    %v1558 = vlaneseq
    %v1559 = vshrl.u32 %v1558, 7
    %v1560 = vsub.s32 1, %v1559
    %v1561 = vrot.slane %v108, %v1560
    %v1564 = vadd.f32 %v1537, %v1557
    %v1565 = vadd.f32 %v1539, %v1561
    %v1566 = vadd.f32 %v1543, %v1557
    %v1567 = vadd.f32 %v1545, %v1561
    %v1568 = vadd.f32 %v1549, %v1557
    %v1569 = vadd.f32 %v1551, %v1561
    %v1570 = vmax.f32 %v1564, 0.0
    %v1571 = vmax.f32 %v1565, 0.0
    %v1572 = vmax.f32 %v1566, 0.0
    %v1573 = vmax.f32 %v1567, 0.0
    %v1574 = vmax.f32 %v1568, 0.0
    %v1575 = vmax.f32 %v1569, 0.0
    %v1576 = vld [vmem:[#allocation7] sm:$0xff]
    %v1577 = vld [vmem:[#allocation7 + $0x8] sm:$0xff]
    %v1578 = vld [vmem:[#allocation7 + $0x10] sm:$0xff]
    %v1579 = vld [vmem:[#allocation7 + $0x18] sm:$0xff]
    %v1580 = vld [vmem:[#allocation7 + $0x20] sm:$0xff]
    %v1581 = vld [vmem:[#allocation7 + $0x28] sm:$0xff]
    %v1582 = vld [vmem:[#allocation7 + $0x30] sm:$0xff]
    %v1583 = vld [vmem:[#allocation7 + $0x38] sm:$0xff]
    %v1584 = vld [vmem:[#allocation7 + $0x40] sm:$0xff]
    %v1585 = vld [vmem:[#allocation7 + $0x48] sm:$0xff]
    %v1586 = vld [vmem:[#allocation7 + $0x50] sm:$0xff]
    %v1587 = vld [vmem:[#allocation7 + $0x58] sm:$0xff]
    %v1588 = vld [vmem:[#allocation7 + $0x60] sm:$0xff]
    %v1589 = vld [vmem:[#allocation7 + $0x68] sm:$0xff]
    %v1590 = vld [vmem:[#allocation7 + $0x70] sm:$0xff]
    %v1591 = vld [vmem:[#allocation7 + $0x78] sm:$0xff]
    %v1592 = vld [vmem:[#allocation7 + $0x80] sm:$0xff]
    %v1593 = vld [vmem:[#allocation7 + $0x88] sm:$0xff]
    %v1594 = vld [vmem:[#allocation7 + $0x90] sm:$0xff]
    %v1595 = vld [vmem:[#allocation7 + $0x98] sm:$0xff]
    %v1596 = vld [vmem:[#allocation7 + $0xa0] sm:$0xff]
    %v1597 = vld [vmem:[#allocation7 + $0xa8] sm:$0xff]
    %v1598 = vld [vmem:[#allocation7 + $0xb0] sm:$0xff]
    %v1599 = vld [vmem:[#allocation7 + $0xb8] sm:$0xff]
    %v1600 = vld [vmem:[#allocation7 + $0xc0] sm:$0xff]
    %v1601 = vld [vmem:[#allocation7 + $0xc8] sm:$0xff]
    %v1602 = vld [vmem:[#allocation7 + $0xd0] sm:$0xff]
    %v1603 = vld [vmem:[#allocation7 + $0xd8] sm:$0xff]
    %v1604 = vld [vmem:[#allocation7 + $0xe0] sm:$0xff]
    %v1605 = vld [vmem:[#allocation7 + $0xe8] sm:$0xff]
    %v1606 = vld [vmem:[#allocation7 + $0xf0] sm:$0xff]
    %v1607 = vld [vmem:[#allocation7 + $0xf8] sm:$0xff]
    %v1608 = vld [vmem:[#allocation7 + $0x100] sm:$0xff]
    %v1609 = vld [vmem:[#allocation7 + $0x108] sm:$0xff]
    %v1610 = vld [vmem:[#allocation7 + $0x110] sm:$0xff]
    %v1611 = vld [vmem:[#allocation7 + $0x118] sm:$0xff]
    %v1612 = vld [vmem:[#allocation7 + $0x120] sm:$0xff]
    %v1613 = vld [vmem:[#allocation7 + $0x128] sm:$0xff]
    %v1614 = vld [vmem:[#allocation7 + $0x130] sm:$0xff]
    %v1615 = vld [vmem:[#allocation7 + $0x138] sm:$0xff]
    %v1616 = vld [vmem:[#allocation7 + $0x140] sm:$0xff]
    %v1617 = vld [vmem:[#allocation7 + $0x148] sm:$0xff]
    %v1618 = vld [vmem:[#allocation7 + $0x150] sm:$0xff]
    %v1619 = vld [vmem:[#allocation7 + $0x158] sm:$0xff]
    %v1620 = vld [vmem:[#allocation7 + $0x160] sm:$0xff]
    %v1621 = vld [vmem:[#allocation7 + $0x168] sm:$0xff]
    %v1622 = vld [vmem:[#allocation7 + $0x170] sm:$0xff]
    %v1623 = vld [vmem:[#allocation7 + $0x178] sm:$0xff]
    %v1624 = vld [vmem:[#allocation7 + $0x180] sm:$0xff]
    %v1625 = vld [vmem:[#allocation7 + $0x188] sm:$0xff]
    %v1626 = vld [vmem:[#allocation7 + $0x190] sm:$0xff]
    %v1627 = vld [vmem:[#allocation7 + $0x198] sm:$0xff]
    %v1628 = vld [vmem:[#allocation7 + $0x1a0] sm:$0xff]
    %v1629 = vld [vmem:[#allocation7 + $0x1a8] sm:$0xff]
    %v1630 = vld [vmem:[#allocation7 + $0x1b0] sm:$0xff]
    %v1631 = vld [vmem:[#allocation7 + $0x1b8] sm:$0xff]
    %v1632 = vld [vmem:[#allocation7 + $0x1c0] sm:$0xff]
    %v1633 = vld [vmem:[#allocation7 + $0x1c8] sm:$0xff]
    %v1634 = vld [vmem:[#allocation7 + $0x1d0] sm:$0xff]
    %v1635 = vld [vmem:[#allocation7 + $0x1d8] sm:$0xff]
    %v1636 = vld [vmem:[#allocation7 + $0x1e0] sm:$0xff]
    %v1637 = vld [vmem:[#allocation7 + $0x1e8] sm:$0xff]
    %v1638 = vld [vmem:[#allocation7 + $0x1f0] sm:$0xff]
    %v1639 = vld [vmem:[#allocation7 + $0x1f8] sm:$0xff]
    %v1640 = vld [vmem:[#allocation7 + $0x200] sm:$0xff]
    %v1641 = vld [vmem:[#allocation7 + $0x208] sm:$0xff]
    %v1642 = vld [vmem:[#allocation7 + $0x210] sm:$0xff]
    %v1643 = vld [vmem:[#allocation7 + $0x218] sm:$0xff]
    %v1644 = vld [vmem:[#allocation7 + $0x220] sm:$0xff]
    %v1645 = vld [vmem:[#allocation7 + $0x228] sm:$0xff]
    %v1646 = vld [vmem:[#allocation7 + $0x230] sm:$0xff]
    %v1647 = vld [vmem:[#allocation7 + $0x238] sm:$0xff]
    %v1648 = vld [vmem:[#allocation7 + $0x240] sm:$0xff]
    %v1649 = vld [vmem:[#allocation7 + $0x248] sm:$0xff]
    %v1650 = vld [vmem:[#allocation7 + $0x250] sm:$0xff]
    %v1651 = vld [vmem:[#allocation7 + $0x258] sm:$0xff]
    %v1652 = vld [vmem:[#allocation7 + $0x260] sm:$0xff]
    %v1653 = vld [vmem:[#allocation7 + $0x268] sm:$0xff]
    %v1654 = vld [vmem:[#allocation7 + $0x270] sm:$0xff]
    %v1655 = vld [vmem:[#allocation7 + $0x278] sm:$0xff]
    %v1656 = vld [vmem:[#allocation7 + $0x280] sm:$0xff]
    %v1657 = vld [vmem:[#allocation7 + $0x288] sm:$0xff]
    %v1658 = vld [vmem:[#allocation7 + $0x290] sm:$0xff]
    %v1659 = vld [vmem:[#allocation7 + $0x298] sm:$0xff]
    %v1660 = vld [vmem:[#allocation7 + $0x2a0] sm:$0xff]
    %v1661 = vld [vmem:[#allocation7 + $0x2a8] sm:$0xff]
    %v1662 = vld [vmem:[#allocation7 + $0x2b0] sm:$0xff]
    %v1663 = vld [vmem:[#allocation7 + $0x2b8] sm:$0xff]
    %v1664 = vld [vmem:[#allocation7 + $0x2c0] sm:$0xff]
    %v1665 = vld [vmem:[#allocation7 + $0x2c8] sm:$0xff]
    %v1666 = vld [vmem:[#allocation7 + $0x2d0] sm:$0xff]
    %v1667 = vld [vmem:[#allocation7 + $0x2d8] sm:$0xff]
    %v1668 = vld [vmem:[#allocation7 + $0x2e0] sm:$0xff]
    %v1669 = vld [vmem:[#allocation7 + $0x2e8] sm:$0xff]
    %v1670 = vld [vmem:[#allocation7 + $0x2f0] sm:$0xff]
    %v1671 = vld [vmem:[#allocation7 + $0x2f8] sm:$0xff]
    %v1672 = vld [vmem:[#allocation7 + $0x300] sm:$0xff]
    %v1673 = vld [vmem:[#allocation7 + $0x308] sm:$0xff]
    %v1674 = vld [vmem:[#allocation7 + $0x310] sm:$0xff]
    %v1675 = vld [vmem:[#allocation7 + $0x318] sm:$0xff]
    %v1676 = vld [vmem:[#allocation7 + $0x320] sm:$0xff]
    %v1677 = vld [vmem:[#allocation7 + $0x328] sm:$0xff]
    %v1678 = vld [vmem:[#allocation7 + $0x330] sm:$0xff]
    %v1679 = vld [vmem:[#allocation7 + $0x338] sm:$0xff]
    %v1680 = vld [vmem:[#allocation7 + $0x340] sm:$0xff]
    %v1681 = vld [vmem:[#allocation7 + $0x348] sm:$0xff]
    %v1682 = vld [vmem:[#allocation7 + $0x350] sm:$0xff]
    %v1683 = vld [vmem:[#allocation7 + $0x358] sm:$0xff]
    %v1684 = vld [vmem:[#allocation7 + $0x360] sm:$0xff]
    %v1685 = vld [vmem:[#allocation7 + $0x368] sm:$0xff]
    %v1686 = vld [vmem:[#allocation7 + $0x370] sm:$0xff]
    %v1687 = vld [vmem:[#allocation7 + $0x378] sm:$0xff]
    %v1688 = vld [vmem:[#allocation7 + $0x380] sm:$0xff]
    %v1689 = vld [vmem:[#allocation7 + $0x388] sm:$0xff]
    %v1690 = vld [vmem:[#allocation7 + $0x390] sm:$0xff]
    %v1691 = vld [vmem:[#allocation7 + $0x398] sm:$0xff]
    %v1692 = vld [vmem:[#allocation7 + $0x3a0] sm:$0xff]
    %v1693 = vld [vmem:[#allocation7 + $0x3a8] sm:$0xff]
    %v1694 = vld [vmem:[#allocation7 + $0x3b0] sm:$0xff]
    %v1695 = vld [vmem:[#allocation7 + $0x3b8] sm:$0xff]
    %v1696 = vld [vmem:[#allocation7 + $0x3c0] sm:$0xff]
    %v1697 = vld [vmem:[#allocation7 + $0x3c8] sm:$0xff]
    %v1698 = vld [vmem:[#allocation7 + $0x3d0] sm:$0xff]
    %v1699 = vld [vmem:[#allocation7 + $0x3d8] sm:$0xff]
    %v1700 = vld [vmem:[#allocation7 + $0x3e0] sm:$0xff]
    %v1701 = vld [vmem:[#allocation7 + $0x3e8] sm:$0xff]
    %v1702 = vld [vmem:[#allocation7 + $0x3f0] sm:$0xff]
    %v1703 = vld [vmem:[#allocation7 + $0x3f8] sm:$0xff]
    %v1705 = vlaneseq
    %v1706 = vshrl.u32 %v1705, 7
    %v1707 = vsub.s32 0, %v1706
    %v1708 = vrot.slane %v109, %v1707
    %v1709 = vlaneseq
    %v1710 = vshrl.u32 %v1709, 7
    %v1711 = vsub.s32 1, %v1710
    %v1712 = vrot.slane %v109, %v1711
    %v1713 = vlaneseq
    %v1714 = vshrl.u32 %v1713, 7
    %v1715 = vsub.s32 2, %v1714
    %v1716 = vrot.slane %v109, %v1715
    %v1717 = vlaneseq
    %v1718 = vshrl.u32 %v1717, 7
    %v1719 = vsub.s32 3, %v1718
    %v1720 = vrot.slane %v109, %v1719
    %1725 = vmatprep.subr.mxu0 %v1577
    %1726 = vmatpush1.msra.mxu0 %v1576
    %1727 = vmatprep.subr.mxu0 %v1581
    %1728 = vmatpush1.msra.mxu0 %v1580
    %1729 = vmatprep.subr.mxu0 %v1585
    %1730 = vmatpush1.msra.mxu0 %v1584
    %1731 = vmatprep.subr.mxu0 %v1589
    %1732 = vmatpush1.msra.mxu0 %v1588
    %1733 = vmatprep.subr.mxu0 %v1593
    %1734 = vmatpush1.msra.mxu0 %v1592
    %1735 = vmatprep.subr.mxu0 %v1597
    %1736 = vmatpush1.msra.mxu0 %v1596
    %1737 = vmatprep.subr.mxu0 %v1601
    %1738 = vmatpush1.msra.mxu0 %v1600
    %1739 = vmatprep.subr.mxu0 %v1605
    %1740 = vmatpush1.msra.mxu0 %v1604
    %1741 = vmatprep.subr.mxu0 %v1609
    %1742 = vmatpush1.msra.mxu0 %v1608
    %1743 = vmatprep.subr.mxu0 %v1613
    %1744 = vmatpush1.msra.mxu0 %v1612
    %1745 = vmatprep.subr.mxu0 %v1617
    %1746 = vmatpush1.msra.mxu0 %v1616
    %1747 = vmatprep.subr.mxu0 %v1621
    %1748 = vmatpush1.msra.mxu0 %v1620
    %1749 = vmatprep.subr.mxu0 %v1625
    %1750 = vmatpush1.msra.mxu0 %v1624
    %1751 = vmatprep.subr.mxu0 %v1629
    %1752 = vmatpush1.msra.mxu0 %v1628
    %1753 = vmatprep.subr.mxu0 %v1633
    %1754 = vmatpush1.msra.mxu0 %v1632
    %1755 = vmatprep.subr.mxu0 %v1637
    %1756 = vmatpush1.msra.mxu0 %v1636
    %1757 = vmatprep.subr.mxu0 %v1641
    %1758 = vmatpush1.msra.mxu0 %v1640
    %1759 = vmatprep.subr.mxu0 %v1645
    %1760 = vmatpush1.msra.mxu0 %v1644
    %1761 = vmatprep.subr.mxu0 %v1649
    %1762 = vmatpush1.msra.mxu0 %v1648
    %1763 = vmatprep.subr.mxu0 %v1653
    %1764 = vmatpush1.msra.mxu0 %v1652
    %1765 = vmatprep.subr.mxu0 %v1657
    %1766 = vmatpush1.msra.mxu0 %v1656
    %1767 = vmatprep.subr.mxu0 %v1661
    %1768 = vmatpush1.msra.mxu0 %v1660
    %1769 = vmatprep.subr.mxu0 %v1665
    %1770 = vmatpush1.msra.mxu0 %v1664
    %1771 = vmatprep.subr.mxu0 %v1669
    %1772 = vmatpush1.msra.mxu0 %v1668
    %1773 = vmatprep.subr.mxu0 %v1673
    %1774 = vmatpush1.msra.mxu0 %v1672
    %1775 = vmatprep.subr.mxu0 %v1677
    %1776 = vmatpush1.msra.mxu0 %v1676
    %1777 = vmatprep.subr.mxu0 %v1681
    %1778 = vmatpush1.msra.mxu0 %v1680
    %1779 = vmatprep.subr.mxu0 %v1685
    %1780 = vmatpush1.msra.mxu0 %v1684
    %1781 = vmatprep.subr.mxu0 %v1689
    %1782 = vmatpush1.msra.mxu0 %v1688
    %1783 = vmatprep.subr.mxu0 %v1693
    %1784 = vmatpush1.msra.mxu0 %v1692
    %1785 = vmatprep.subr.mxu0 %v1697
    %1786 = vmatpush1.msra.mxu0 %v1696
    %1787 = vmatprep.subr.mxu0 %v1701
    %1788 = vmatpush1.msra.mxu0 %v1700
    %1789 = vmatprep.mubr.f32.mxu0 %v1571
    %1790 = vmatmul.mubr.f32.gmra.mrb[0].mxu0 %v1570
    %v1791 = vpop.f32.mrb[0].mxu0
    %v1792 = vadd.f32 %v1708, %v1791
    %v1793 = vpop.f32.mrb[0].mxu0
    %v1794 = vadd.f32 %v1712, %v1793
    %1795 = vmatprep.mubr.f32.mxu0 %v1573
    %1796 = vmatmul.mubr.f32.gmra.mrb[0].mxu0 %v1572
    %v1797 = vpop.f32.mrb[0].mxu0
    %v1798 = vadd.f32 %v1708, %v1797
    %v1799 = vpop.f32.mrb[0].mxu0
    %v1800 = vadd.f32 %v1712, %v1799
    %1801 = vmatprep.mubr.f32.mxu0 %v1575
    %1802 = vmatmul.mubr.f32.gmra.mrb[0].mxu0 %v1574
    %v1803 = vpop.f32.mrb[0].mxu0
    %v1804 = vadd.f32 %v1708, %v1803
    %v1805 = vpop.f32.mrb[0].mxu0
    %v1806 = vadd.f32 %v1712, %v1805
    %1807 = vdwg.mxu0
    %1808 = vmatprep.subr.mxu0 %v1579
    %1809 = vmatpush1.msra.mxu0 %v1578
    %1810 = vmatprep.subr.mxu0 %v1583
    %1811 = vmatpush1.msra.mxu0 %v1582
    %1812 = vmatprep.subr.mxu0 %v1587
    %1813 = vmatpush1.msra.mxu0 %v1586
    %1814 = vmatprep.subr.mxu0 %v1591
    %1815 = vmatpush1.msra.mxu0 %v1590
    %1816 = vmatprep.subr.mxu0 %v1595
    %1817 = vmatpush1.msra.mxu0 %v1594
    %1818 = vmatprep.subr.mxu0 %v1599
    %1819 = vmatpush1.msra.mxu0 %v1598
    %1820 = vmatprep.subr.mxu0 %v1603
    %1821 = vmatpush1.msra.mxu0 %v1602
    %1822 = vmatprep.subr.mxu0 %v1607
    %1823 = vmatpush1.msra.mxu0 %v1606
    %1824 = vmatprep.subr.mxu0 %v1611
    %1825 = vmatpush1.msra.mxu0 %v1610
    %1826 = vmatprep.subr.mxu0 %v1615
    %1827 = vmatpush1.msra.mxu0 %v1614
    %1828 = vmatprep.subr.mxu0 %v1619
    %1829 = vmatpush1.msra.mxu0 %v1618
    %1830 = vmatprep.subr.mxu0 %v1623
    %1831 = vmatpush1.msra.mxu0 %v1622
    %1832 = vmatprep.subr.mxu0 %v1627
    %1833 = vmatpush1.msra.mxu0 %v1626
    %1834 = vmatprep.subr.mxu0 %v1631
    %1835 = vmatpush1.msra.mxu0 %v1630
    %1836 = vmatprep.subr.mxu0 %v1635
    %1837 = vmatpush1.msra.mxu0 %v1634
    %1838 = vmatprep.subr.mxu0 %v1639
    %1839 = vmatpush1.msra.mxu0 %v1638
    %1840 = vmatprep.subr.mxu0 %v1643
    %1841 = vmatpush1.msra.mxu0 %v1642
    %1842 = vmatprep.subr.mxu0 %v1647
    %1843 = vmatpush1.msra.mxu0 %v1646
    %1844 = vmatprep.subr.mxu0 %v1651
    %1845 = vmatpush1.msra.mxu0 %v1650
    %1846 = vmatprep.subr.mxu0 %v1655
    %1847 = vmatpush1.msra.mxu0 %v1654
    %1848 = vmatprep.subr.mxu0 %v1659
    %1849 = vmatpush1.msra.mxu0 %v1658
    %1850 = vmatprep.subr.mxu0 %v1663
    %1851 = vmatpush1.msra.mxu0 %v1662
    %1852 = vmatprep.subr.mxu0 %v1667
    %1853 = vmatpush1.msra.mxu0 %v1666
    %1854 = vmatprep.subr.mxu0 %v1671
    %1855 = vmatpush1.msra.mxu0 %v1670
    %1856 = vmatprep.subr.mxu0 %v1675
    %1857 = vmatpush1.msra.mxu0 %v1674
    %1858 = vmatprep.subr.mxu0 %v1679
    %1859 = vmatpush1.msra.mxu0 %v1678
    %1860 = vmatprep.subr.mxu0 %v1683
    %1861 = vmatpush1.msra.mxu0 %v1682
    %1862 = vmatprep.subr.mxu0 %v1687
    %1863 = vmatpush1.msra.mxu0 %v1686
    %1864 = vmatprep.subr.mxu0 %v1691
    %1865 = vmatpush1.msra.mxu0 %v1690
    %1866 = vmatprep.subr.mxu0 %v1695
    %1867 = vmatpush1.msra.mxu0 %v1694
    %1868 = vmatprep.subr.mxu0 %v1699
    %1869 = vmatpush1.msra.mxu0 %v1698
    %1870 = vmatprep.subr.mxu0 %v1703
    %1871 = vmatpush1.msra.mxu0 %v1702
    %1872 = vmatprep.mubr.f32.mxu0 %v1571
    %1873 = vmatmul.mubr.f32.gmra.mrb[0].mxu0 %v1570
    %v1874 = vpop.f32.mrb[0].mxu0
    %v1875 = vadd.f32 %v1716, %v1874
    %v1876 = vpop.f32.mrb[0].mxu0
    %v1877 = vadd.f32 %v1720, %v1876
    %1878 = vmatprep.mubr.f32.mxu0 %v1573
    %1879 = vmatmul.mubr.f32.gmra.mrb[0].mxu0 %v1572
    %v1880 = vpop.f32.mrb[0].mxu0
    %v1881 = vadd.f32 %v1716, %v1880
    %v1882 = vpop.f32.mrb[0].mxu0
    %v1883 = vadd.f32 %v1720, %v1882
    %1884 = vmatprep.mubr.f32.mxu0 %v1575
    %1885 = vmatmul.mubr.f32.gmra.mrb[0].mxu0 %v1574
    %v1886 = vpop.f32.mrb[0].mxu0
    %v1887 = vadd.f32 %v1716, %v1886
    %v1888 = vpop.f32.mrb[0].mxu0
    %v1889 = vadd.f32 %v1720, %v1888
    %1890 = vdwg.mxu0
    %v1891 = vld [vmem:[%s7] sm:$0xff]
    %v1892 = vld [vmem:[%s7 + $0x8] sm:$0xff]
    %v1893 = vld [vmem:[%s7 + $0x10] sm:$0xff]
    %v1894 = vld [vmem:[%s7 + $0x18] sm:$0xff]
    %v1895 = vld [vmem:[%s7 + $0x20] sm:$0xff]
    %v1896 = vld [vmem:[%s7 + $0x28] sm:$0xff]
    %v1897 = vld [vmem:[%s7 + $0x30] sm:$0xff]
    %v1898 = vld [vmem:[%s7 + $0x38] sm:$0xff]
    %v1899 = vld [vmem:[%s7 + $0x40] sm:$0xff]
    %v1900 = vld [vmem:[%s7 + $0x48] sm:$0xff]
    %v1901 = vld [vmem:[%s7 + $0x50] sm:$0xff]
    %v1902 = vld [vmem:[%s7 + $0x58] sm:$0xff]
    %v1903 = vld [vmem:[%s7 + $0x60] sm:$0xff]
    %v1904 = vld [vmem:[%s7 + $0x68] sm:$0xff]
    %v1905 = vld [vmem:[%s7 + $0x70] sm:$0xff]
    %v1906 = vld [vmem:[%s7 + $0x78] sm:$0xff]
    %v1907 = vld [vmem:[%s7 + $0x80] sm:$0xff]
    %v1908 = vld [vmem:[%s7 + $0x88] sm:$0xff]
    %v1909 = vld [vmem:[%s7 + $0x90] sm:$0xff]
    %v1910 = vld [vmem:[%s7 + $0x98] sm:$0xff]
    %v1911 = vld [vmem:[%s7 + $0xa0] sm:$0xff]
    %v1912 = vld [vmem:[%s7 + $0xa8] sm:$0xff]
    %v1913 = vld [vmem:[%s7 + $0xb0] sm:$0xff]
    %v1914 = vld [vmem:[%s7 + $0xb8] sm:$0xff]
    %v1915 = vld [vmem:[%s7 + $0xc0] sm:$0xff]
    %v1916 = vld [vmem:[%s7 + $0xc8] sm:$0xff]
    %v1917 = vld [vmem:[%s7 + $0xd0] sm:$0xff]
    %v1918 = vld [vmem:[%s7 + $0xd8] sm:$0xff]
    %v1919 = vld [vmem:[%s7 + $0xe0] sm:$0xff]
    %v1920 = vld [vmem:[%s7 + $0xe8] sm:$0xff]
    %v1921 = vld [vmem:[%s7 + $0xf0] sm:$0xff]
    %v1922 = vld [vmem:[%s7 + $0xf8] sm:$0xff]
    %v1923 = vld [vmem:[%s7 + $0x100] sm:$0xff]
    %v1924 = vld [vmem:[%s7 + $0x108] sm:$0xff]
    %v1925 = vld [vmem:[%s7 + $0x110] sm:$0xff]
    %v1926 = vld [vmem:[%s7 + $0x118] sm:$0xff]
    %v1927 = vld [vmem:[%s7 + $0x120] sm:$0xff]
    %v1928 = vld [vmem:[%s7 + $0x128] sm:$0xff]
    %v1929 = vld [vmem:[%s7 + $0x130] sm:$0xff]
    %v1930 = vld [vmem:[%s7 + $0x138] sm:$0xff]
    %v1931 = vld [vmem:[%s7 + $0x140] sm:$0xff]
    %v1932 = vld [vmem:[%s7 + $0x148] sm:$0xff]
    %v1933 = vld [vmem:[%s7 + $0x150] sm:$0xff]
    %v1934 = vld [vmem:[%s7 + $0x158] sm:$0xff]
    %v1935 = vld [vmem:[%s7 + $0x160] sm:$0xff]
    %v1936 = vld [vmem:[%s7 + $0x168] sm:$0xff]
    %v1937 = vld [vmem:[%s7 + $0x170] sm:$0xff]
    %v1938 = vld [vmem:[%s7 + $0x178] sm:$0xff]
    %v1939 = vld [vmem:[%s7 + $0x180] sm:$0xff]
    %v1940 = vld [vmem:[%s7 + $0x188] sm:$0xff]
    %v1941 = vld [vmem:[%s7 + $0x190] sm:$0xff]
    %v1942 = vld [vmem:[%s7 + $0x198] sm:$0xff]
    %v1943 = vld [vmem:[%s7 + $0x1a0] sm:$0xff]
    %v1944 = vld [vmem:[%s7 + $0x1a8] sm:$0xff]
    %v1945 = vld [vmem:[%s7 + $0x1b0] sm:$0xff]
    %v1946 = vld [vmem:[%s7 + $0x1b8] sm:$0xff]
    %v1947 = vld [vmem:[%s7 + $0x1c0] sm:$0xff]
    %v1948 = vld [vmem:[%s7 + $0x1c8] sm:$0xff]
    %v1949 = vld [vmem:[%s7 + $0x1d0] sm:$0xff]
    %v1950 = vld [vmem:[%s7 + $0x1d8] sm:$0xff]
    %v1951 = vld [vmem:[%s7 + $0x1e0] sm:$0xff]
    %v1952 = vld [vmem:[%s7 + $0x1e8] sm:$0xff]
    %v1953 = vld [vmem:[%s7 + $0x1f0] sm:$0xff]
    %v1954 = vld [vmem:[%s7 + $0x1f8] sm:$0xff]
    %1955 = vmatprep.subr.mxu0 0.0
    %1956 = vmatpush1.msra.mxu0 %v1891
    %1957 = vmatprep.subr.mxu0 0.0
    %1958 = vmatpush1.msra.mxu0 %v1892
    %1959 = vmatprep.subr.mxu0 0.0
    %1960 = vmatpush1.msra.mxu0 %v1893
    %1961 = vmatprep.subr.mxu0 0.0
    %1962 = vmatpush1.msra.mxu0 %v1894
    %1963 = vmatprep.subr.mxu0 0.0
    %1964 = vmatpush1.msra.mxu0 %v1895
    %1965 = vmatprep.subr.mxu0 0.0
    %1966 = vmatpush1.msra.mxu0 %v1896
    %1967 = vmatprep.subr.mxu0 0.0
    %1968 = vmatpush1.msra.mxu0 %v1897
    %1969 = vmatprep.subr.mxu0 0.0
    %1970 = vmatpush1.msra.mxu0 %v1898
    %1971 = vmatprep.subr.mxu0 0.0
    %1972 = vmatpush1.msra.mxu0 %v1899
    %1973 = vmatprep.subr.mxu0 0.0
    %1974 = vmatpush1.msra.mxu0 %v1900
    %1975 = vmatprep.subr.mxu0 0.0
    %1976 = vmatpush1.msra.mxu0 %v1901
    %1977 = vmatprep.subr.mxu0 0.0
    %1978 = vmatpush1.msra.mxu0 %v1902
    %1979 = vmatprep.subr.mxu0 0.0
    %1980 = vmatpush1.msra.mxu0 %v1903
    %1981 = vmatprep.subr.mxu0 0.0
    %1982 = vmatpush1.msra.mxu0 %v1904
    %1983 = vmatprep.subr.mxu0 0.0
    %1984 = vmatpush1.msra.mxu0 %v1905
    %1985 = vmatprep.subr.mxu0 0.0
    %1986 = vmatpush1.msra.mxu0 %v1906
    %1987 = vmatprep.subr.mxu0 0.0
    %1988 = vmatpush1.msra.mxu0 %v1907
    %1989 = vmatprep.subr.mxu0 0.0
    %1990 = vmatpush1.msra.mxu0 %v1908
    %1991 = vmatprep.subr.mxu0 0.0
    %1992 = vmatpush1.msra.mxu0 %v1909
    %1993 = vmatprep.subr.mxu0 0.0
    %1994 = vmatpush1.msra.mxu0 %v1910
    %1995 = vmatprep.subr.mxu0 0.0
    %1996 = vmatpush1.msra.mxu0 %v1911
    %1997 = vmatprep.subr.mxu0 0.0
    %1998 = vmatpush1.msra.mxu0 %v1912
    %1999 = vmatprep.subr.mxu0 0.0
    %2000 = vmatpush1.msra.mxu0 %v1913
    %2001 = vmatprep.subr.mxu0 0.0
    %2002 = vmatpush1.msra.mxu0 %v1914
    %2003 = vmatprep.subr.mxu0 0.0
    %2004 = vmatpush1.msra.mxu0 %v1915
    %2005 = vmatprep.subr.mxu0 0.0
    %2006 = vmatpush1.msra.mxu0 %v1916
    %2007 = vmatprep.subr.mxu0 0.0
    %2008 = vmatpush1.msra.mxu0 %v1917
    %2009 = vmatprep.subr.mxu0 0.0
    %2010 = vmatpush1.msra.mxu0 %v1918
    %2011 = vmatprep.subr.mxu0 0.0
    %2012 = vmatpush1.msra.mxu0 %v1919
    %2013 = vmatprep.subr.mxu0 0.0
    %2014 = vmatpush1.msra.mxu0 %v1920
    %2015 = vmatprep.subr.mxu0 0.0
    %2016 = vmatpush1.msra.mxu0 %v1921
    %2017 = vmatprep.subr.mxu0 0.0
    %2018 = vmatpush1.msra.mxu0 %v1922
    %2019 = vmatprep.mubr.f32.mxu0 %v1794
    %2020 = vmatmul.mubr.f32.gmra.mrb[0].mxu0 %v1792
    %v2021 = vpop.f32.mrb[0].mxu0
    %v2022 = vadd.f32 0.0, %v2021
    %v2023 = vpop.f32.mrb[0].mxu0
    %2024 = vmatprep.mubr.f32.mxu0 %v1800
    %2025 = vmatmul.mubr.f32.gmra.mrb[0].mxu0 %v1798
    %v2026 = vpop.f32.mrb[0].mxu0
    %v2027 = vadd.f32 0.0, %v2026
    %v2028 = vpop.f32.mrb[0].mxu0
    %2029 = vmatprep.mubr.f32.mxu0 %v1806
    %2030 = vmatmul.mubr.f32.gmra.mrb[0].mxu0 %v1804
    %v2031 = vpop.f32.mrb[0].mxu0
    %v2032 = vadd.f32 0.0, %v2031
    %v2033 = vpop.f32.mrb[0].mxu0
    %2034 = vdwg.mxu0
    %2035 = vmatprep.subr.mxu0 0.0
    %2036 = vmatpush1.msra.mxu0 %v1923
    %2037 = vmatprep.subr.mxu0 0.0
    %2038 = vmatpush1.msra.mxu0 %v1924
    %2039 = vmatprep.subr.mxu0 0.0
    %2040 = vmatpush1.msra.mxu0 %v1925
    %2041 = vmatprep.subr.mxu0 0.0
    %2042 = vmatpush1.msra.mxu0 %v1926
    %2043 = vmatprep.subr.mxu0 0.0
    %2044 = vmatpush1.msra.mxu0 %v1927
    %2045 = vmatprep.subr.mxu0 0.0
    %2046 = vmatpush1.msra.mxu0 %v1928
    %2047 = vmatprep.subr.mxu0 0.0
    %2048 = vmatpush1.msra.mxu0 %v1929
    %2049 = vmatprep.subr.mxu0 0.0
    %2050 = vmatpush1.msra.mxu0 %v1930
    %2051 = vmatprep.subr.mxu0 0.0
    %2052 = vmatpush1.msra.mxu0 %v1931
    %2053 = vmatprep.subr.mxu0 0.0
    %2054 = vmatpush1.msra.mxu0 %v1932
    %2055 = vmatprep.subr.mxu0 0.0
    %2056 = vmatpush1.msra.mxu0 %v1933
    %2057 = vmatprep.subr.mxu0 0.0
    %2058 = vmatpush1.msra.mxu0 %v1934
    %2059 = vmatprep.subr.mxu0 0.0
    %2060 = vmatpush1.msra.mxu0 %v1935
    %2061 = vmatprep.subr.mxu0 0.0
    %2062 = vmatpush1.msra.mxu0 %v1936
    %2063 = vmatprep.subr.mxu0 0.0
    %2064 = vmatpush1.msra.mxu0 %v1937
    %2065 = vmatprep.subr.mxu0 0.0
    %2066 = vmatpush1.msra.mxu0 %v1938
    %2067 = vmatprep.subr.mxu0 0.0
    %2068 = vmatpush1.msra.mxu0 %v1939
    %2069 = vmatprep.subr.mxu0 0.0
    %2070 = vmatpush1.msra.mxu0 %v1940
    %2071 = vmatprep.subr.mxu0 0.0
    %2072 = vmatpush1.msra.mxu0 %v1941
    %2073 = vmatprep.subr.mxu0 0.0
    %2074 = vmatpush1.msra.mxu0 %v1942
    %2075 = vmatprep.subr.mxu0 0.0
    %2076 = vmatpush1.msra.mxu0 %v1943
    %2077 = vmatprep.subr.mxu0 0.0
    %2078 = vmatpush1.msra.mxu0 %v1944
    %2079 = vmatprep.subr.mxu0 0.0
    %2080 = vmatpush1.msra.mxu0 %v1945
    %2081 = vmatprep.subr.mxu0 0.0
    %2082 = vmatpush1.msra.mxu0 %v1946
    %2083 = vmatprep.subr.mxu0 0.0
    %2084 = vmatpush1.msra.mxu0 %v1947
    %2085 = vmatprep.subr.mxu0 0.0
    %2086 = vmatpush1.msra.mxu0 %v1948
    %2087 = vmatprep.subr.mxu0 0.0
    %2088 = vmatpush1.msra.mxu0 %v1949
    %2089 = vmatprep.subr.mxu0 0.0
    %2090 = vmatpush1.msra.mxu0 %v1950
    %2091 = vmatprep.subr.mxu0 0.0
    %2092 = vmatpush1.msra.mxu0 %v1951
    %2093 = vmatprep.subr.mxu0 0.0
    %2094 = vmatpush1.msra.mxu0 %v1952
    %2095 = vmatprep.subr.mxu0 0.0
    %2096 = vmatpush1.msra.mxu0 %v1953
    %2097 = vmatprep.subr.mxu0 0.0
    %2098 = vmatpush1.msra.mxu0 %v1954
    %2099 = vmatprep.mubr.f32.mxu0 %v1877
    %2100 = vmatmul.mubr.f32.gmra.mrb[0].mxu0 %v1875
    %v2101 = vpop.f32.mrb[0].mxu0
    %v2102 = vadd.f32 %v2022, %v2101
    %v2103 = vpop.f32.mrb[0].mxu0
    %2104 = vmatprep.mubr.f32.mxu0 %v1883
    %2105 = vmatmul.mubr.f32.gmra.mrb[0].mxu0 %v1881
    %v2106 = vpop.f32.mrb[0].mxu0
    %v2107 = vadd.f32 %v2027, %v2106
    %v2108 = vpop.f32.mrb[0].mxu0
    %2109 = vmatprep.mubr.f32.mxu0 %v1889
    %2110 = vmatmul.mubr.f32.gmra.mrb[0].mxu0 %v1887
    %v2111 = vpop.f32.mrb[0].mxu0
    %v2112 = vadd.f32 %v2032, %v2111
    %v2113 = vpop.f32.mrb[0].mxu0
    %2114 = vdwg.mxu0
    %v2115 = vmul.f32 %v1009, %v2102
    %v2116 = vmul.f32 %v1010, %v2107
    %v2117 = vmul.f32 %v1011, %v2112
    %v2118 = vlaneseq
    %v2119 = vshrl.u32 %v2118, 7
    %v2120 = vsub.s32 0, %v2119
    %v2121 = vrot.slane %v113, %v2120
    %vm2122 = vcmask 195584
    %v2124 = vsel %vm2122, %v1012, 0
    %2126 = vmatprep.subr.mxu0 0.0
    %2127 = vmatpush1.msra.mxu0 %v2115
    %2128 = vmatprep.subr.mxu0 0.0
    %2129 = vmatpush1.msra.mxu0 %v2116
    %2130 = vmatprep.subr.mxu0 0.0
    %2131 = vmatpush1.msra.mxu0 %v2117
    %2132 = vmatprep.subr.mxu0 0.0
    %2133 = vmatpush1.msra.mxu0 0.0
    %2134 = vmatprep.subr.mxu0 0.0
    %2135 = vmatpush1.msra.mxu0 0.0
    %2136 = vmatprep.subr.mxu0 0.0
    %2137 = vmatpush1.msra.mxu0 0.0
    %2138 = vmatprep.subr.mxu0 0.0
    %2139 = vmatpush1.msra.mxu0 0.0
    %2140 = vmatprep.subr.mxu0 0.0
    %2141 = vmatpush1.msra.mxu0 0.0
    %2142 = vmatprep.subr.mxu0 0.0
    %2143 = vmatpush1.msra.mxu0 0.0
    %2144 = vmatprep.subr.mxu0 0.0
    %2145 = vmatpush1.msra.mxu0 0.0
    %2146 = vmatprep.subr.mxu0 0.0
    %2147 = vmatpush1.msra.mxu0 0.0
    %2148 = vmatprep.subr.mxu0 0.0
    %2149 = vmatpush1.msra.mxu0 0.0
    %2150 = vmatprep.subr.mxu0 0.0
    %2151 = vmatpush1.msra.mxu0 0.0
    %2152 = vmatprep.subr.mxu0 0.0
    %2153 = vmatpush1.msra.mxu0 0.0
    %2154 = vmatprep.subr.mxu0 0.0
    %2155 = vmatpush1.msra.mxu0 0.0
    %2156 = vmatprep.subr.mxu0 0.0
    %2157 = vmatpush1.msra.mxu0 0.0
    %2158 = vmatprep.subr.mxu0 0.0
    %2159 = vmatpush1.msra.mxu0 0.0
    %2160 = vmatprep.subr.mxu0 0.0
    %2161 = vmatpush1.msra.mxu0 0.0
    %2162 = vmatprep.subr.mxu0 0.0
    %2163 = vmatpush1.msra.mxu0 0.0
    %2164 = vmatprep.subr.mxu0 0.0
    %2165 = vmatpush1.msra.mxu0 0.0
    %2166 = vmatprep.subr.mxu0 0.0
    %2167 = vmatpush1.msra.mxu0 0.0
    %2168 = vmatprep.subr.mxu0 0.0
    %2169 = vmatpush1.msra.mxu0 0.0
    %2170 = vmatprep.subr.mxu0 0.0
    %2171 = vmatpush1.msra.mxu0 0.0
    %2172 = vmatprep.subr.mxu0 0.0
    %2173 = vmatpush1.msra.mxu0 0.0
    %2174 = vmatprep.subr.mxu0 0.0
    %2175 = vmatpush1.msra.mxu0 0.0
    %2176 = vmatprep.subr.mxu0 0.0
    %2177 = vmatpush1.msra.mxu0 0.0
    %2178 = vmatprep.subr.mxu0 0.0
    %2179 = vmatpush1.msra.mxu0 0.0
    %2180 = vmatprep.subr.mxu0 0.0
    %2181 = vmatpush1.msra.mxu0 0.0
    %2182 = vmatprep.subr.mxu0 0.0
    %2183 = vmatpush1.msra.mxu0 0.0
    %2184 = vmatprep.subr.mxu0 0.0
    %2185 = vmatpush1.msra.mxu0 0.0
    %2186 = vmatprep.subr.mxu0 0.0
    %2187 = vmatpush1.msra.mxu0 0.0
    %2188 = vmatprep.subr.mxu0 0.0
    %2189 = vmatpush1.msra.mxu0 0.0
    %2190 = vmatprep.mubr.f32.mxu0 0.0
    %2191 = vmatmul.mubr.f32.gmra.mrb[0].mxu0 %v2124
    %v2192 = vpop.f32.mrb[0].mxu0
    %v2193 = vadd.f32 %v2121, %v2192
    %v2194 = vpop.f32.mrb[0].mxu0
    %2195 = vdwg.mxu0
    %vm2196 = vcmask 44032
    %2197 = vst.msk [vmem:[#allocation12] sm:$0xf] %vm2196, %v2193
    // Predicated region
    $region82: #{tpu_custom_call.1} parent=1 // pred_check
      _
    $region83: #{tpu_custom_call.1} parent=1 // pred_check_branch
      %2199 = sbr.rel (0) target = $region85
    $region84: #{tpu_custom_call.1} parent=1 // pred_region
      %s2201 = ssub.s32 64, 64
      %2202 = vsyncadd [#allocation4], %s2201
      %s2204 = sshll.u32 [#allocation8], 4
      %s2205 = int_to_ptr.vmem [resolvable:$true] %s2204
      %2207 = dma.vmem_to_hbm [thread:$0]  %s2205, 64, %s17, [#allocation4]
    $region85: #{tpu_custom_call.1} parent=1 // pred_fallthru
      _
    // Predicated region
    $region86: #{tpu_custom_call.1} parent=1 // pred_check
      _
    $region87: #{tpu_custom_call.1} parent=1 // pred_check_branch
      %2209 = sbr.rel (0) target = $region89
    $region88: #{tpu_custom_call.1} parent=1 // pred_region
      %s2211 = ssub.s32 64, 64
      %2212 = vsyncadd [#allocation10], %s2211
      %s2214 = sshll.u32 [#allocation9], 4
      %s2215 = int_to_ptr.vmem [resolvable:$true] %s2214
      %2217 = dma.vmem_to_hbm [thread:$0]  %s2215, 64, %s18, [#allocation10]
    $region89: #{tpu_custom_call.1} parent=1 // pred_fallthru
      _
    // Predicated region
    $region90: #{tpu_custom_call.1} parent=1 // pred_check
      _
    $region91: #{tpu_custom_call.1} parent=1 // pred_check_branch
      %2219 = sbr.rel (0) target = $region93
    $region92: #{tpu_custom_call.1} parent=1 // pred_region
      %s2221 = ssub.s32 128, 128
      %2222 = vsyncadd [#allocation10], %s2221
      %s2224 = sshll.u32 [#allocation11], 4
      %s2225 = int_to_ptr.vmem [resolvable:$true] %s2224
      %2227 = dma.vmem_to_hbm [thread:$0]  %s2225, 128, %s19, [#allocation10]
    $region93: #{tpu_custom_call.1} parent=1 // pred_fallthru
      _
    // Predicated region
    $region94: #{tpu_custom_call.1} parent=1 // pred_check
      _
    $region95: #{tpu_custom_call.1} parent=1 // pred_check_branch
      %2229 = sbr.rel (0) target = $region97
    $region96: #{tpu_custom_call.1} parent=1 // pred_region
      %s2231 = ssub.s32 64, 64
      %2232 = vsyncadd [#allocation13], %s2231
      %s2234 = sshll.u32 [#allocation12], 4
      %s2235 = int_to_ptr.vmem [resolvable:$true] %s2234
      %2237 = dma.vmem_to_hbm [thread:$0]  %s2235, 64, %s20, [#allocation13]
    $region97: #{tpu_custom_call.1} parent=1 // pred_fallthru
      _
    // Predicated region
    $region98: #{tpu_custom_call.1} parent=1 // pred_check
      _
    $region99: #{tpu_custom_call.1} parent=1 // pred_check_branch
      %2239 = sbr.rel (0) target = $region101
    $region100: #{tpu_custom_call.1} parent=1 // pred_region
      %2240 = dma.done [#allocation4], 64
    $region101: #{tpu_custom_call.1} parent=1 // pred_fallthru
      _
    // Predicated region
    $region102: #{tpu_custom_call.1} parent=1 // pred_check
      _
    $region103: #{tpu_custom_call.1} parent=1 // pred_check_branch
      %2242 = sbr.rel (0) target = $region105
    $region104: #{tpu_custom_call.1} parent=1 // pred_region
      %2243 = dma.done [#allocation10], 64
    $region105: #{tpu_custom_call.1} parent=1 // pred_fallthru
      _
    // Predicated region
    $region106: #{tpu_custom_call.1} parent=1 // pred_check
      _
    $region107: #{tpu_custom_call.1} parent=1 // pred_check_branch
      %2245 = sbr.rel (0) target = $region109
    $region108: #{tpu_custom_call.1} parent=1 // pred_region
      %2246 = dma.done [#allocation10], 128
    $region109: #{tpu_custom_call.1} parent=1 // pred_fallthru
      _
    // Predicated region
    $region110: #{tpu_custom_call.1} parent=1 // pred_check
      _
    $region111: #{tpu_custom_call.1} parent=1 // pred_check_branch
      %2248 = sbr.rel (0) target = $region113
    $region112: #{tpu_custom_call.1} parent=1 // pred_region
      %2249 = dma.done [#allocation13], 64
    $region113: #{tpu_custom_call.1} parent=1 // pred_fallthru
      _
    %2250 = vsyncpa [#allocation3], 1
    %2251 = vsyncpa [#allocation6], 1
    %2252 = vsyncpa [#allocation4], 1
    %2253 = vsyncpa [#allocation10], 1
    %2254 = vsyncpa [#allocation13], 1

</llo_original>
